<compile_context>
chip_gen: v7x
topology: tpu7x:2x2x1
jax: 0.10.0
libtpu: 0.0.40
codegen_flags: <defaults>
</compile_context>

<pallas_src>
import math
import functools

import jax
import jax.numpy as jnp
from jax import lax
from jax.experimental import pallas as pl
from jax.experimental.pallas import tpu as pltpu


_NEG_INF = -1e30          # large finite negative (safe f32 masking for softmax)
VOCAB_TILE = 1024         # lane-dense (multiple of 128) vocab tile for lm_head


@functools.lru_cache(maxsize=None)
def _vmem_limit_bytes():
    # Generation-aware scoped-VMEM budget (v5e/v6e: 128 MiB physical, v7x: 64 MiB).
    try:
        cap = pltpu.get_tpu_info().vmem_capacity_bytes
        return int(min(100 * 1024 * 1024, 0.75 * cap))
    except Exception:
        return 64 * 1024 * 1024


# --------------------------------------------------------------------------
# helpers (traced inside kernels) — all f32 elementwise math
# --------------------------------------------------------------------------
def _layernorm(x, g, b, eps=1e-5):
    mu = jnp.mean(x, axis=-1, keepdims=True)
    xc = x - mu
    var = jnp.mean(xc * xc, axis=-1, keepdims=True)
    return xc * lax.rsqrt(var + eps) * g + b


def _new_gelu(x):
    c = math.sqrt(2.0 / math.pi)
    return 0.5 * x * (1.0 + jnp.tanh(c * (x + 0.044715 * x * x * x)))


# --------------------------------------------------------------------------
# Transformer block kernel: per-batch-element fused
# (ln1 -> flash attention -> +res -> ln2 -> mlp -> +res). Grid over batch.
# --------------------------------------------------------------------------
def _block_kernel(x_ref,
                  ln1g_ref, ln1b_ref,
                  wqkv_ref, bqkv_ref,
                  wproj_ref, bproj_ref,
                  ln2g_ref, ln2b_ref,
                  wfc_ref, bfc_ref,
                  wfc2_ref, bfc2_ref,
                  o_ref, *, n_head, kv_tile):
    x = x_ref[0]                                   # (T, C) f32 residual stream
    T, C = x.shape
    hd = C // n_head
    scale = 1.0 / math.sqrt(hd)

    # ---- attention branch: LN (f32) -> qkv projection (bf16 MXU, f32 acc) ----
    h1 = _layernorm(x, ln1g_ref[...], ln1b_ref[...])
    qkv = jnp.dot(h1.astype(jnp.bfloat16), wqkv_ref[...],
                  preferred_element_type=jnp.float32) + bqkv_ref[...]  # (T, 3C) f32
    qkv = qkv.astype(jnp.bfloat16)

    # Head-major (H, T, hd) operands so the score / PV matmuls are single
    # head-batched einsums (no k.T transpose, no per-head matmul loop).
    q = jnp.stack([qkv[:, h * hd:(h + 1) * hd] for h in range(n_head)], axis=0)
    k = jnp.stack([qkv[:, C + h * hd:C + (h + 1) * hd] for h in range(n_head)], axis=0)
    v = jnp.stack([qkv[:, 2 * C + h * hd:2 * C + (h + 1) * hd]
                   for h in range(n_head)], axis=0)

    # causal-mask iotas computed once per grid step (not per KV tile)
    rows = lax.broadcasted_iota(jnp.int32, (1, T, kv_tile), 1)
    cols = lax.broadcasted_iota(jnp.int32, (1, T, kv_tile), 2)

    # flash-style online softmax over KV tiles; stats kept in f32
    m_i = jnp.full((n_head, T, 1), _NEG_INF, jnp.float32)
    l_i = jnp.zeros((n_head, T, 1), jnp.float32)
    acc = jnp.zeros((n_head, T, hd), jnp.float32)
    num_kv = T // kv_tile
    for j in range(num_kv):
        k_j = k[:, j * kv_tile:(j + 1) * kv_tile, :]      # (H, kv, hd) bf16
        v_j = v[:, j * kv_tile:(j + 1) * kv_tile, :]
        s = jnp.einsum('htd,hsd->hts', q, k_j,
                       preferred_element_type=jnp.float32) * scale
        s = jnp.where((cols + j * kv_tile) <= rows, s, _NEG_INF)
        m_new = jnp.maximum(m_i, jnp.max(s, axis=-1, keepdims=True))
        alpha = jnp.exp(m_i - m_new)
        p = jnp.exp(s - m_new)                            # f32
        l_i = alpha * l_i + jnp.sum(p, axis=-1, keepdims=True)
        acc = alpha * acc + jnp.einsum('hts,hsd->htd', p.astype(jnp.bfloat16),
                                       v_j, preferred_element_type=jnp.float32)
        m_i = m_new
    yh = acc / l_i                                        # (H, T, hd) f32

    # merge heads back to (T, C) and project (bf16 MXU, f32 acc)
    y = jnp.concatenate([yh[h] for h in range(n_head)], axis=-1)
    y = jnp.dot(y.astype(jnp.bfloat16), wproj_ref[...],
                preferred_element_type=jnp.float32) + bproj_ref[...]
    x = x + y                                             # residual in f32

    # ---- MLP branch ----
    h2 = _layernorm(x, ln2g_ref[...], ln2b_ref[...])
    m1 = jnp.dot(h2.astype(jnp.bfloat16), wfc_ref[...],
                 preferred_element_type=jnp.float32) + bfc_ref[...]     # (T, 4C)
    m1 = _new_gelu(m1)                                    # f32 elementwise
    m2 = jnp.dot(m1.astype(jnp.bfloat16), wfc2_ref[...],
                 preferred_element_type=jnp.float32) + bfc2_ref[...]    # (T, C)
    o_ref[0] = x + m2


def transformer_block(x, blk_params, n_head):
    B, T, C = x.shape
    assert C % n_head == 0
    hd = C // n_head
    (ln1g, ln1b, wqkv, bqkv, wproj, bproj,
     ln2g, ln2b, wfc, bfc, wfc2, bfc2) = blk_params

    kv_tile = 256 if T % 256 == 0 else (128 if T % 128 == 0 else T)
    kernel = functools.partial(_block_kernel, n_head=n_head, kv_tile=kv_tile)

    def rep2(a):  # whole-array 2-D block, constant across the batch grid axis
        return pl.BlockSpec(a.shape, lambda b: (0, 0))

    # advisory cost estimate for XLA's scheduler
    flops = B * (2 * T * C * (3 * C + C + 4 * C + 4 * C) + 4 * n_head * T * T * hd)
    transc = B * (T * 4 * C + n_head * T * T)
    bytes_acc = (2 * B * T * C * 4                                   # x in/out f32
                 + 2 * (C * 3 * C + C * C + C * 4 * C + 4 * C * C)   # bf16 weights
                 + 4 * (3 * C + C + 4 * C + C + 4 * C))              # biases / LN

    # TODO(synk): on v7x, single-buffer the constant-index weight specs
    # (pipeline_mode=pl.Buffered(1)) or split attn/MLP into two calls to halve
    # resident weight VMEM at GPT-2 scale.
    return pl.pallas_call(
        kernel,
        out_shape=jax.ShapeDtypeStruct((B, T, C), jnp.float32),
        grid=(B,),
        in_specs=[
            pl.BlockSpec((1, T, C), lambda b: (b, 0, 0)),
            rep2(ln1g), rep2(ln1b), rep2(wqkv), rep2(bqkv),
            rep2(wproj), rep2(bproj), rep2(ln2g), rep2(ln2b),
            rep2(wfc), rep2(bfc), rep2(wfc2), rep2(bfc2),
        ],
        out_specs=pl.BlockSpec((1, T, C), lambda b: (b, 0, 0)),
        compiler_params=pltpu.CompilerParams(
            dimension_semantics=("parallel",),
            vmem_limit_bytes=_vmem_limit_bytes()),
        cost_estimate=pl.CostEstimate(flops=flops, transcendentals=transc,
                                      bytes_accessed=bytes_acc),
    )(x, ln1g, ln1b, wqkv, bqkv, wproj, bproj,
      ln2g, ln2b, wfc, bfc, wfc2, bfc2)


# --------------------------------------------------------------------------
# Final layernorm + lm_head kernel, tiled over the (padded) vocab dimension
# --------------------------------------------------------------------------
def _lm_kernel(x_ref, lnfg_ref, lnfb_ref, wlm_ref, o_ref):
    xn = _layernorm(x_ref[0], lnfg_ref[...], lnfb_ref[...])     # (T, C) f32
    o_ref[0] = jnp.dot(xn.astype(jnp.bfloat16), wlm_ref[...],
                       preferred_element_type=jnp.float32)      # (T, tv) f32


def lm_head(x, lnfg, lnfb, wlm_padded, vocab_tile):
    B, T, C = x.shape
    Vp = wlm_padded.shape[1]
    assert Vp % vocab_tile == 0
    nv = Vp // vocab_tile

    flops = 2 * B * T * C * Vp
    bytes_acc = B * T * C * 4 + C * Vp * 2 + B * T * Vp * 4

    return pl.pallas_call(
        _lm_kernel,
        out_shape=jax.ShapeDtypeStruct((B, T, Vp), jnp.float32),
        grid=(B, nv),
        in_specs=[
            pl.BlockSpec((1, T, C), lambda b, v: (b, 0, 0)),
            pl.BlockSpec(lnfg.shape, lambda b, v: (0, 0)),
            pl.BlockSpec(lnfb.shape, lambda b, v: (0, 0)),
            pl.BlockSpec((C, vocab_tile), lambda b, v: (0, v)),
        ],
        out_specs=pl.BlockSpec((1, T, vocab_tile), lambda b, v: (b, 0, v)),
        compiler_params=pltpu.CompilerParams(
            dimension_semantics=("parallel", "parallel"),
            vmem_limit_bytes=_vmem_limit_bytes()),
        cost_estimate=pl.CostEstimate(flops=flops, transcendentals=B * T,
                                      bytes_accessed=bytes_acc),
    )(x, lnfg, lnfb, wlm_padded)


# --------------------------------------------------------------------------
# Parameter construction (deterministic, synthetic); matmul weights in bf16,
# LN params / biases / embeddings in f32.
# --------------------------------------------------------------------------
def init_params(key, vocab_size, block_size, n_layer, n_embd):
    C = n_embd
    keys = jax.random.split(key, 3 + 5 * n_layer)
    ki = iter(keys)

    def nrm(k, shape, std=0.02):
        return jax.random.normal(k, shape, jnp.float32) * std

    v_pad = ((vocab_size + VOCAB_TILE - 1) // VOCAB_TILE) * VOCAB_TILE
    lm_w = nrm(next(ki), (C, vocab_size))
    lm_w = jnp.pad(lm_w, ((0, 0), (0, v_pad - vocab_size)))

    params = dict(
        vocab_size=vocab_size,
        wte=nrm(next(ki), (vocab_size, C)),
        wpe=nrm(next(ki), (block_size, C)),
        lnf_g=jnp.ones((1, C), jnp.float32),
        lnf_b=jnp.zeros((1, C), jnp.float32),
        lm_w=lm_w.astype(jnp.bfloat16),               # (C, V_pad) bf16
        blocks=[],
    )
    for _ in range(n_layer):
        blk = (
            jnp.ones((1, C), jnp.float32),                         # ln1 gamma
            jnp.zeros((1, C), jnp.float32),                        # ln1 beta
            nrm(next(ki), (C, 3 * C)).astype(jnp.bfloat16),        # c_attn W (in,out)
            jnp.zeros((1, 3 * C), jnp.float32),                    # c_attn b
            nrm(next(ki), (C, C)).astype(jnp.bfloat16),            # c_proj W
            jnp.zeros((1, C), jnp.float32),                        # c_proj b
            jnp.ones((1, C), jnp.float32),                         # ln2 gamma
            jnp.zeros((1, C), jnp.float32),                        # ln2 beta
            nrm(next(ki), (C, 4 * C)).astype(jnp.bfloat16),        # c_fc W
            jnp.zeros((1, 4 * C), jnp.float32),                    # c_fc b
            nrm(next(ki), (4 * C, C)).astype(jnp.bfloat16),        # mlp c_proj W
            jnp.zeros((1, C), jnp.float32),                        # mlp c_proj b
        )
        params["blocks"].append(blk)
    return params


# --------------------------------------------------------------------------
# GPT forward
# --------------------------------------------------------------------------
def gpt_forward(idx, params, n_head, targets=None):
    B, T = idx.shape
    # glue: embedding gathers + positional add (dropout == identity / eval mode)
    tok_emb = jnp.take(params["wte"], idx, axis=0)                 # (B, T, C)
    pos_emb = params["wpe"][:T][None, :, :]                        # (1, T, C)
    x = tok_emb + pos_emb

    for blk in params["blocks"]:
        x = transformer_block(x, blk, n_head)

    logits_padded = lm_head(x, params["lnf_g"], params["lnf_b"],
                            params["lm_w"], VOCAB_TILE)
    V = params["vocab_size"]
    logits = logits_padded[..., :V]

    loss = None
    if targets is not None:
        # TODO(synk): fuse the cross-entropy (online logsumexp + target-logit gather)
        # into the vocab-tiled lm_head kernel so full logits never hit HBM.
        lg = logits.reshape(-1, V)
        tg = targets.reshape(-1)
        valid = tg != -1
        tg_safe = jnp.where(valid, tg, 0)
        logz = jax.nn.logsumexp(lg, axis=-1)
        ll = jnp.take_along_axis(lg, tg_safe[:, None], axis=-1)[:, 0]
        nll = jnp.where(valid, logz - ll, 0.0)
        loss = jnp.sum(nll) / jnp.maximum(jnp.sum(valid), 1)
    return logits, loss


# --------------------------------------------------------------------------
if __name__ == "__main__":
    # small config consistent with GPTConfig semantics
    vocab_size = 64
    block_size = 16
    n_layer = 2
    n_head = 2
    n_embd = 32
    B, T = 2, 8

    key = jax.random.PRNGKey(0)
    k_param, k_idx = jax.random.split(key)
    params = init_params(k_param, vocab_size, block_size, n_layer, n_embd)
    idx = jax.random.randint(k_idx, (B, T), 0, vocab_size, dtype=jnp.int32)

    logits, loss = gpt_forward(idx, params, n_head, targets=None)
    logits = jax.block_until_ready(logits)

    assert logits.shape == (B, T, vocab_size)
    assert jnp.all(jnp.isfinite(logits))
    print("KERNEL_OK")
</pallas_src>

<mosaic_0001>
module attributes {stable_mosaic.version = 11 : i64} {
  func.func @_block_kernel(%arg0: i32, %arg1: memref<1x8x32xf32, #tpu.memory_space<vmem>>, %arg2: memref<1x32xf32, #tpu.memory_space<vmem>>, %arg3: memref<1x32xf32, #tpu.memory_space<vmem>>, %arg4: memref<32x96xbf16, #tpu.memory_space<vmem>>, %arg5: memref<1x96xf32, #tpu.memory_space<vmem>>, %arg6: memref<32x32xbf16, #tpu.memory_space<vmem>>, %arg7: memref<1x32xf32, #tpu.memory_space<vmem>>, %arg8: memref<1x32xf32, #tpu.memory_space<vmem>>, %arg9: memref<1x32xf32, #tpu.memory_space<vmem>>, %arg10: memref<32x128xbf16, #tpu.memory_space<vmem>>, %arg11: memref<1x128xf32, #tpu.memory_space<vmem>>, %arg12: memref<128x32xbf16, #tpu.memory_space<vmem>>, %arg13: memref<1x32xf32, #tpu.memory_space<vmem>>, %arg14: memref<1x8x32xf32, #tpu.memory_space<vmem>>) attributes {dimension_semantics = [#tpu.dimension_semantics<parallel>], iteration_bounds = array<i64: 2>, scalar_prefetch = 0 : i64, scratch_operands = 0 : i64, tpu.core_type = #tpu.core_type<tc>, window_params = [{transform_indices = @transform_0, window_bounds = array<i64: 1, 8, 32>}, {pipeline_mode = #tpu.pipeline_mode<synchronous>, transform_indices = @transform_1, window_bounds = array<i64: 1, 32>}, {pipeline_mode = #tpu.pipeline_mode<synchronous>, transform_indices = @transform_2, window_bounds = array<i64: 1, 32>}, {pipeline_mode = #tpu.pipeline_mode<synchronous>, transform_indices = @transform_3, window_bounds = array<i64: 32, 96>}, {pipeline_mode = #tpu.pipeline_mode<synchronous>, transform_indices = @transform_4, window_bounds = array<i64: 1, 96>}, {pipeline_mode = #tpu.pipeline_mode<synchronous>, transform_indices = @transform_5, window_bounds = array<i64: 32, 32>}, {pipeline_mode = #tpu.pipeline_mode<synchronous>, transform_indices = @transform_6, window_bounds = array<i64: 1, 32>}, {pipeline_mode = #tpu.pipeline_mode<synchronous>, transform_indices = @transform_7, window_bounds = array<i64: 1, 32>}, {pipeline_mode = #tpu.pipeline_mode<synchronous>, transform_indices = @transform_8, window_bounds = array<i64: 1, 32>}, {pipeline_mode = #tpu.pipeline_mode<synchronous>, transform_indices = @transform_9, window_bounds = array<i64: 32, 128>}, {pipeline_mode = #tpu.pipeline_mode<synchronous>, transform_indices = @transform_10, window_bounds = array<i64: 1, 128>}, {pipeline_mode = #tpu.pipeline_mode<synchronous>, transform_indices = @transform_11, window_bounds = array<i64: 128, 32>}, {pipeline_mode = #tpu.pipeline_mode<synchronous>, transform_indices = @transform_12, window_bounds = array<i64: 1, 32>}, {transform_indices = @transform_13, window_bounds = array<i64: 1, 8, 32>}]} {
    %c0 = arith.constant 0 : index
    %c0_0 = arith.constant 0 : index
    %c0_1 = arith.constant 0 : index
    %0 = vector.load %arg1[%c0, %c0_0, %c0_1] : memref<1x8x32xf32, #tpu.memory_space<vmem>>, vector<1x8x32xf32>
    %1 = vector.shape_cast %0 : vector<1x8x32xf32> to vector<8x32xf32>
    %c0_2 = arith.constant 0 : index
    %c0_3 = arith.constant 0 : index
    %2 = vector.load %arg2[%c0_2, %c0_3] : memref<1x32xf32, #tpu.memory_space<vmem>>, vector<1x32xf32>
    %c0_4 = arith.constant 0 : index
    %c0_5 = arith.constant 0 : index
    %3 = vector.load %arg3[%c0_4, %c0_5] : memref<1x32xf32, #tpu.memory_space<vmem>>, vector<1x32xf32>
    %cst = arith.constant dense<0.000000e+00> : vector<8xf32>
    %4 = vector.multi_reduction <add>, %1, %cst [1] : vector<8x32xf32> to vector<8xf32>
    %5 = vector.shape_cast %4 : vector<8xf32> to vector<8x1xf32>
    %cst_6 = arith.constant 3.200000e+01 : f32
    %6 = vector.broadcast %cst_6 : f32 to vector<8x1xf32>
    %7 = arith.divf %5, %6 : vector<8x1xf32>
    %8 = vector.broadcast %7 : vector<8x1xf32> to vector<8x32xf32>
    %9 = arith.subf %1, %8 : vector<8x32xf32>
    %10 = arith.mulf %9, %9 : vector<8x32xf32>
    %cst_7 = arith.constant dense<0.000000e+00> : vector<8xf32>
    %11 = vector.multi_reduction <add>, %10, %cst_7 [1] : vector<8x32xf32> to vector<8xf32>
    %12 = vector.shape_cast %11 : vector<8xf32> to vector<8x1xf32>
    %cst_8 = arith.constant 3.200000e+01 : f32
    %13 = vector.broadcast %cst_8 : f32 to vector<8x1xf32>
    %14 = arith.divf %12, %13 : vector<8x1xf32>
    %cst_9 = arith.constant 9.99999974E-6 : f32
    %15 = vector.broadcast %cst_9 : f32 to vector<8x1xf32>
    %16 = arith.addf %14, %15 : vector<8x1xf32>
    %17 = math.rsqrt %16 : vector<8x1xf32>
    %18 = vector.broadcast %17 : vector<8x1xf32> to vector<8x32xf32>
    %19 = arith.mulf %9, %18 : vector<8x32xf32>
    %20 = vector.broadcast %2 : vector<1x32xf32> to vector<8x32xf32>
    %21 = arith.mulf %19, %20 : vector<8x32xf32>
    %22 = vector.broadcast %3 : vector<1x32xf32> to vector<8x32xf32>
    %23 = arith.addf %21, %22 : vector<8x32xf32>
    %24 = arith.truncf %23 : vector<8x32xf32> to vector<8x32xbf16>
    %c0_10 = arith.constant 0 : index
    %c0_11 = arith.constant 0 : index
    %25 = vector.load %arg4[%c0_10, %c0_11] : memref<32x96xbf16, #tpu.memory_space<vmem>>, vector<32x96xbf16>
    %cst_12 = arith.constant dense<0.000000e+00> : vector<8x96xf32>
    %26 = tpu.matmul %24, %25, %cst_12 {dimension_numbers = #tpu.dot_dimension_numbers<[1], [0], [0], [1], [0, 0, 1, 1], [], []>} : vector<8x32xbf16>, vector<32x96xbf16>, vector<8x96xf32> -> vector<8x96xf32>
    %c0_13 = arith.constant 0 : index
    %c0_14 = arith.constant 0 : index
    %27 = vector.load %arg5[%c0_13, %c0_14] : memref<1x96xf32, #tpu.memory_space<vmem>>, vector<1x96xf32>
    %28 = vector.broadcast %27 : vector<1x96xf32> to vector<8x96xf32>
    %29 = arith.addf %26, %28 : vector<8x96xf32>
    %30 = arith.truncf %29 : vector<8x96xf32> to vector<8x96xbf16>
    %31 = vector.extract_strided_slice %30 {offsets = [0, 0], sizes = [8, 16], strides = [1, 1]} : vector<8x96xbf16> to vector<8x16xbf16>
    %32 = vector.extract_strided_slice %30 {offsets = [0, 16], sizes = [8, 16], strides = [1, 1]} : vector<8x96xbf16> to vector<8x16xbf16>
    %33 = vector.shape_cast %31 : vector<8x16xbf16> to vector<1x8x16xbf16>
    %34 = vector.shape_cast %32 : vector<8x16xbf16> to vector<1x8x16xbf16>
    %35 = tpu.concatenate %33, %34 in 0 : vector<1x8x16xbf16>, vector<1x8x16xbf16> -> vector<2x8x16xbf16>
    %36 = vector.extract_strided_slice %30 {offsets = [0, 32], sizes = [8, 16], strides = [1, 1]} : vector<8x96xbf16> to vector<8x16xbf16>
    %37 = vector.extract_strided_slice %30 {offsets = [0, 48], sizes = [8, 16], strides = [1, 1]} : vector<8x96xbf16> to vector<8x16xbf16>
    %38 = vector.shape_cast %36 : vector<8x16xbf16> to vector<1x8x16xbf16>
    %39 = vector.shape_cast %37 : vector<8x16xbf16> to vector<1x8x16xbf16>
    %40 = tpu.concatenate %38, %39 in 0 : vector<1x8x16xbf16>, vector<1x8x16xbf16> -> vector<2x8x16xbf16>
    %41 = vector.extract_strided_slice %30 {offsets = [0, 64], sizes = [8, 16], strides = [1, 1]} : vector<8x96xbf16> to vector<8x16xbf16>
    %42 = vector.extract_strided_slice %30 {offsets = [0, 80], sizes = [8, 16], strides = [1, 1]} : vector<8x96xbf16> to vector<8x16xbf16>
    %43 = vector.shape_cast %41 : vector<8x16xbf16> to vector<1x8x16xbf16>
    %44 = vector.shape_cast %42 : vector<8x16xbf16> to vector<1x8x16xbf16>
    %45 = tpu.concatenate %43, %44 in 0 : vector<1x8x16xbf16>, vector<1x8x16xbf16> -> vector<2x8x16xbf16>
    %46 = tpu.iota {dimensions = array<i32: 1>} : vector<1x8x8xi32>
    %47 = tpu.iota {dimensions = array<i32: 2>} : vector<1x8x8xi32>
    %cst_15 = arith.constant -1.000000e+30 : f32
    %48 = vector.broadcast %cst_15 : f32 to vector<2x8x1xf32>
    %cst_16 = arith.constant 0.000000e+00 : f32
    %49 = vector.broadcast %cst_16 : f32 to vector<2x8x1xf32>
    %cst_17 = arith.constant 0.000000e+00 : f32
    %50 = vector.broadcast %cst_17 : f32 to vector<2x8x16xf32>
    "tpu.trace_start"() <{level = 10 : i32, message = "htd,hsd->hts"}> : () -> ()
    %cst_18 = arith.constant dense<0.000000e+00> : vector<2x8x8xf32>
    %51 = tpu.matmul %35, %40, %cst_18 {dimension_numbers = #tpu.dot_dimension_numbers<[2], [2], [1], [1], [0, 0, 0, 1, 1, 1], [0], [0]>} : vector<2x8x16xbf16>, vector<2x8x16xbf16>, vector<2x8x8xf32> -> vector<2x8x8xf32>
    "tpu.trace_stop"() : () -> ()
    %cst_19 = arith.constant 2.500000e-01 : f32
    %52 = vector.broadcast %cst_19 : f32 to vector<2x8x8xf32>
    %53 = arith.mulf %51, %52 : vector<2x8x8xf32>
    %c0_i32 = arith.constant 0 : i32
    %54 = vector.broadcast %c0_i32 : i32 to vector<1x8x8xi32>
    %55 = arith.addi %47, %54 : vector<1x8x8xi32>
    %56 = arith.cmpi sle, %55, %46 : vector<1x8x8xi32>
    %cst_20 = arith.constant -1.000000e+30 : f32
    %57 = vector.shape_cast %56 : vector<1x8x8xi1> to vector<1x8x8xi1>
    %58 = vector.broadcast %57 : vector<1x8x8xi1> to vector<2x8x8xi1>
    %59 = vector.broadcast %cst_20 : f32 to vector<2x8x8xf32>
    %60 = arith.select %58, %53, %59 : vector<2x8x8xi1>, vector<2x8x8xf32>
    %cst_21 = arith.constant dense<0xFF800000> : vector<2x8xf32>
    %61 = vector.multi_reduction <maximumf>, %60, %cst_21 [2] : vector<2x8x8xf32> to vector<2x8xf32>
    %62 = vector.shape_cast %61 : vector<2x8xf32> to vector<2x8x1xf32>
    %63 = arith.maximumf %48, %62 : vector<2x8x1xf32>
    %64 = arith.subf %48, %63 : vector<2x8x1xf32>
    %65 = math.exp %64 : vector<2x8x1xf32>
    %66 = vector.broadcast %63 : vector<2x8x1xf32> to vector<2x8x8xf32>
    %67 = arith.subf %60, %66 : vector<2x8x8xf32>
    %68 = math.exp %67 : vector<2x8x8xf32>
    %69 = arith.mulf %65, %49 : vector<2x8x1xf32>
    %cst_22 = arith.constant dense<0.000000e+00> : vector<2x8xf32>
    %70 = vector.multi_reduction <add>, %68, %cst_22 [2] : vector<2x8x8xf32> to vector<2x8xf32>
    %71 = vector.shape_cast %70 : vector<2x8xf32> to vector<2x8x1xf32>
    %72 = arith.addf %69, %71 : vector<2x8x1xf32>
    %73 = vector.broadcast %65 : vector<2x8x1xf32> to vector<2x8x16xf32>
    %74 = arith.mulf %73, %50 : vector<2x8x16xf32>
    %75 = arith.truncf %68 : vector<2x8x8xf32> to vector<2x8x8xbf16>
    "tpu.trace_start"() <{level = 10 : i32, message = "hts,hsd->htd"}> : () -> ()
    %cst_23 = arith.constant dense<0.000000e+00> : vector<2x8x16xf32>
    %76 = tpu.matmul %75, %45, %cst_23 {dimension_numbers = #tpu.dot_dimension_numbers<[2], [1], [1], [2], [0, 0, 0, 1, 1, 2], [0], [0]>} : vector<2x8x8xbf16>, vector<2x8x16xbf16>, vector<2x8x16xf32> -> vector<2x8x16xf32>
    "tpu.trace_stop"() : () -> ()
    %77 = arith.addf %74, %76 : vector<2x8x16xf32>
    %78 = vector.broadcast %72 : vector<2x8x1xf32> to vector<2x8x16xf32>
    %79 = arith.divf %77, %78 : vector<2x8x16xf32>
    %80 = vector.extract_strided_slice %79 {offsets = [0, 0, 0], sizes = [1, 8, 16], strides = [1, 1, 1]} : vector<2x8x16xf32> to vector<1x8x16xf32>
    %81 = vector.shape_cast %80 : vector<1x8x16xf32> to vector<8x16xf32>
    %82 = vector.extract_strided_slice %79 {offsets = [1, 0, 0], sizes = [1, 8, 16], strides = [1, 1, 1]} : vector<2x8x16xf32> to vector<1x8x16xf32>
    %83 = vector.shape_cast %82 : vector<1x8x16xf32> to vector<8x16xf32>
    %84 = tpu.concatenate %81, %83 in 1 : vector<8x16xf32>, vector<8x16xf32> -> vector<8x32xf32>
    %85 = arith.truncf %84 : vector<8x32xf32> to vector<8x32xbf16>
    %c0_24 = arith.constant 0 : index
    %c0_25 = arith.constant 0 : index
    %86 = vector.load %arg6[%c0_24, %c0_25] : memref<32x32xbf16, #tpu.memory_space<vmem>>, vector<32x32xbf16>
    %cst_26 = arith.constant dense<0.000000e+00> : vector<8x32xf32>
    %87 = tpu.matmul %85, %86, %cst_26 {dimension_numbers = #tpu.dot_dimension_numbers<[1], [0], [0], [1], [0, 0, 1, 1], [], []>} : vector<8x32xbf16>, vector<32x32xbf16>, vector<8x32xf32> -> vector<8x32xf32>
    %c0_27 = arith.constant 0 : index
    %c0_28 = arith.constant 0 : index
    %88 = vector.load %arg7[%c0_27, %c0_28] : memref<1x32xf32, #tpu.memory_space<vmem>>, vector<1x32xf32>
    %89 = vector.broadcast %88 : vector<1x32xf32> to vector<8x32xf32>
    %90 = arith.addf %87, %89 : vector<8x32xf32>
    %91 = arith.addf %1, %90 : vector<8x32xf32>
    %c0_29 = arith.constant 0 : index
    %c0_30 = arith.constant 0 : index
    %92 = vector.load %arg8[%c0_29, %c0_30] : memref<1x32xf32, #tpu.memory_space<vmem>>, vector<1x32xf32>
    %c0_31 = arith.constant 0 : index
    %c0_32 = arith.constant 0 : index
    %93 = vector.load %arg9[%c0_31, %c0_32] : memref<1x32xf32, #tpu.memory_space<vmem>>, vector<1x32xf32>
    %cst_33 = arith.constant dense<0.000000e+00> : vector<8xf32>
    %94 = vector.multi_reduction <add>, %91, %cst_33 [1] : vector<8x32xf32> to vector<8xf32>
    %95 = vector.shape_cast %94 : vector<8xf32> to vector<8x1xf32>
    %cst_34 = arith.constant 3.200000e+01 : f32
    %96 = vector.broadcast %cst_34 : f32 to vector<8x1xf32>
    %97 = arith.divf %95, %96 : vector<8x1xf32>
    %98 = vector.broadcast %97 : vector<8x1xf32> to vector<8x32xf32>
    %99 = arith.subf %91, %98 : vector<8x32xf32>
    %100 = arith.mulf %99, %99 : vector<8x32xf32>
    %cst_35 = arith.constant dense<0.000000e+00> : vector<8xf32>
    %101 = vector.multi_reduction <add>, %100, %cst_35 [1] : vector<8x32xf32> to vector<8xf32>
    %102 = vector.shape_cast %101 : vector<8xf32> to vector<8x1xf32>
    %cst_36 = arith.constant 3.200000e+01 : f32
    %103 = vector.broadcast %cst_36 : f32 to vector<8x1xf32>
    %104 = arith.divf %102, %103 : vector<8x1xf32>
    %cst_37 = arith.constant 9.99999974E-6 : f32
    %105 = vector.broadcast %cst_37 : f32 to vector<8x1xf32>
    %106 = arith.addf %104, %105 : vector<8x1xf32>
    %107 = math.rsqrt %106 : vector<8x1xf32>
    %108 = vector.broadcast %107 : vector<8x1xf32> to vector<8x32xf32>
    %109 = arith.mulf %99, %108 : vector<8x32xf32>
    %110 = vector.broadcast %92 : vector<1x32xf32> to vector<8x32xf32>
    %111 = arith.mulf %109, %110 : vector<8x32xf32>
    %112 = vector.broadcast %93 : vector<1x32xf32> to vector<8x32xf32>
    %113 = arith.addf %111, %112 : vector<8x32xf32>
    %114 = arith.truncf %113 : vector<8x32xf32> to vector<8x32xbf16>
    %c0_38 = arith.constant 0 : index
    %c0_39 = arith.constant 0 : index
    %115 = vector.load %arg10[%c0_38, %c0_39] : memref<32x128xbf16, #tpu.memory_space<vmem>>, vector<32x128xbf16>
    %cst_40 = arith.constant dense<0.000000e+00> : vector<8x128xf32>
    %116 = tpu.matmul %114, %115, %cst_40 {dimension_numbers = #tpu.dot_dimension_numbers<[1], [0], [0], [1], [0, 0, 1, 1], [], []>} : vector<8x32xbf16>, vector<32x128xbf16>, vector<8x128xf32> -> vector<8x128xf32>
    %c0_41 = arith.constant 0 : index
    %c0_42 = arith.constant 0 : index
    %117 = vector.load %arg11[%c0_41, %c0_42] : memref<1x128xf32, #tpu.memory_space<vmem>>, vector<1x128xf32>
    %118 = vector.broadcast %117 : vector<1x128xf32> to vector<8x128xf32>
    %119 = arith.addf %116, %118 : vector<8x128xf32>
    %cst_43 = arith.constant 5.000000e-01 : f32
    %120 = vector.broadcast %cst_43 : f32 to vector<8x128xf32>
    %121 = arith.mulf %120, %119 : vector<8x128xf32>
    %cst_44 = arith.constant 4.471500e-02 : f32
    %122 = vector.broadcast %cst_44 : f32 to vector<8x128xf32>
    %123 = arith.mulf %122, %119 : vector<8x128xf32>
    %124 = arith.mulf %123, %119 : vector<8x128xf32>
    %125 = arith.mulf %124, %119 : vector<8x128xf32>
    %126 = arith.addf %119, %125 : vector<8x128xf32>
    %cst_45 = arith.constant 0.797884583 : f32
    %127 = vector.broadcast %cst_45 : f32 to vector<8x128xf32>
    %128 = arith.mulf %127, %126 : vector<8x128xf32>
    %129 = math.tanh %128 : vector<8x128xf32>
    %cst_46 = arith.constant 1.000000e+00 : f32
    %130 = vector.broadcast %cst_46 : f32 to vector<8x128xf32>
    %131 = arith.addf %130, %129 : vector<8x128xf32>
    %132 = arith.mulf %121, %131 : vector<8x128xf32>
    %133 = arith.truncf %132 : vector<8x128xf32> to vector<8x128xbf16>
    %c0_47 = arith.constant 0 : index
    %c0_48 = arith.constant 0 : index
    %134 = vector.load %arg12[%c0_47, %c0_48] : memref<128x32xbf16, #tpu.memory_space<vmem>>, vector<128x32xbf16>
    %cst_49 = arith.constant dense<0.000000e+00> : vector<8x32xf32>
    %135 = tpu.matmul %133, %134, %cst_49 {dimension_numbers = #tpu.dot_dimension_numbers<[1], [0], [0], [1], [0, 0, 1, 1], [], []>} : vector<8x128xbf16>, vector<128x32xbf16>, vector<8x32xf32> -> vector<8x32xf32>
    %c0_50 = arith.constant 0 : index
    %c0_51 = arith.constant 0 : index
    %136 = vector.load %arg13[%c0_50, %c0_51] : memref<1x32xf32, #tpu.memory_space<vmem>>, vector<1x32xf32>
    %137 = vector.broadcast %136 : vector<1x32xf32> to vector<8x32xf32>
    %138 = arith.addf %135, %137 : vector<8x32xf32>
    %139 = arith.addf %91, %138 : vector<8x32xf32>
    %c0_52 = arith.constant 0 : index
    %c0_53 = arith.constant 0 : index
    %c0_54 = arith.constant 0 : index
    %140 = vector.load %arg14[%c0_52, %c0_53, %c0_54] : memref<1x8x32xf32, #tpu.memory_space<vmem>>, vector<1x8x32xf32>
    %141 = vector.shape_cast %140 : vector<1x8x32xf32> to vector<8x32xf32>
    %142 = vector.shape_cast %139 : vector<8x32xf32> to vector<1x8x32xf32>
    tpu.vector_store %arg14[%c0_52, %c0_53, %c0_54], %142 {strides = array<i32>} : memref<1x8x32xf32, #tpu.memory_space<vmem>>, vector<1x8x32xf32>,
    return
  }
  func.func @transform_0(%arg0: i32) -> (i32, i32, i32) {
    %c0_i32 = arith.constant 0 : i32
    %c0_i32_0 = arith.constant 0 : i32
    %c0_i32_1 = arith.constant 0 : i32
    return %arg0, %c0_i32, %c0_i32_0 : i32, i32, i32
  }
  func.func @transform_1(%arg0: i32) -> (i32, i32) {
    %c0_i32 = arith.constant 0 : i32
    %c0_i32_0 = arith.constant 0 : i32
    %c0_i32_1 = arith.constant 0 : i32
    return %c0_i32, %c0_i32_0 : i32, i32
  }
  func.func @transform_2(%arg0: i32) -> (i32, i32) {
    %c0_i32 = arith.constant 0 : i32
    %c0_i32_0 = arith.constant 0 : i32
    %c0_i32_1 = arith.constant 0 : i32
    return %c0_i32, %c0_i32_0 : i32, i32
  }
  func.func @transform_3(%arg0: i32) -> (i32, i32) {
    %c0_i32 = arith.constant 0 : i32
    %c0_i32_0 = arith.constant 0 : i32
    %c0_i32_1 = arith.constant 0 : i32
    return %c0_i32, %c0_i32_0 : i32, i32
  }
  func.func @transform_4(%arg0: i32) -> (i32, i32) {
    %c0_i32 = arith.constant 0 : i32
    %c0_i32_0 = arith.constant 0 : i32
    %c0_i32_1 = arith.constant 0 : i32
    return %c0_i32, %c0_i32_0 : i32, i32
  }
  func.func @transform_5(%arg0: i32) -> (i32, i32) {
    %c0_i32 = arith.constant 0 : i32
    %c0_i32_0 = arith.constant 0 : i32
    %c0_i32_1 = arith.constant 0 : i32
    return %c0_i32, %c0_i32_0 : i32, i32
  }
  func.func @transform_6(%arg0: i32) -> (i32, i32) {
    %c0_i32 = arith.constant 0 : i32
    %c0_i32_0 = arith.constant 0 : i32
    %c0_i32_1 = arith.constant 0 : i32
    return %c0_i32, %c0_i32_0 : i32, i32
  }
  func.func @transform_7(%arg0: i32) -> (i32, i32) {
    %c0_i32 = arith.constant 0 : i32
    %c0_i32_0 = arith.constant 0 : i32
    %c0_i32_1 = arith.constant 0 : i32
    return %c0_i32, %c0_i32_0 : i32, i32
  }
  func.func @transform_8(%arg0: i32) -> (i32, i32) {
    %c0_i32 = arith.constant 0 : i32
    %c0_i32_0 = arith.constant 0 : i32
    %c0_i32_1 = arith.constant 0 : i32
    return %c0_i32, %c0_i32_0 : i32, i32
  }
  func.func @transform_9(%arg0: i32) -> (i32, i32) {
    %c0_i32 = arith.constant 0 : i32
    %c0_i32_0 = arith.constant 0 : i32
    %c0_i32_1 = arith.constant 0 : i32
    return %c0_i32, %c0_i32_0 : i32, i32
  }
  func.func @transform_10(%arg0: i32) -> (i32, i32) {
    %c0_i32 = arith.constant 0 : i32
    %c0_i32_0 = arith.constant 0 : i32
    %c0_i32_1 = arith.constant 0 : i32
    return %c0_i32, %c0_i32_0 : i32, i32
  }
  func.func @transform_11(%arg0: i32) -> (i32, i32) {
    %c0_i32 = arith.constant 0 : i32
    %c0_i32_0 = arith.constant 0 : i32
    %c0_i32_1 = arith.constant 0 : i32
    return %c0_i32, %c0_i32_0 : i32, i32
  }
  func.func @transform_12(%arg0: i32) -> (i32, i32) {
    %c0_i32 = arith.constant 0 : i32
    %c0_i32_0 = arith.constant 0 : i32
    %c0_i32_1 = arith.constant 0 : i32
    return %c0_i32, %c0_i32_0 : i32, i32
  }
  func.func @transform_13(%arg0: i32) -> (i32, i32, i32) {
    %c0_i32 = arith.constant 0 : i32
    %c0_i32_0 = arith.constant 0 : i32
    %c0_i32_1 = arith.constant 0 : i32
    return %arg0, %c0_i32, %c0_i32_0 : i32, i32, i32
  }
}

</mosaic_0001>

<llo_original>
// kernel: tpu_custom_call.1
$region0: #{tpu_custom_call.1}
  #allocation0 [shape = 'u32[]', space=smem, size = 0x4, offset = 0x4, fixed_abs, tag = 'smem constant byte address 0x4 - core index']
  #allocation1 [shape = 'u32[144,128]{1,0:T(1,128)}', space=vmem, size = 0x12000, scoped, tag = 'internal scratch']
  %s0 = inlined_call_operand.hbm [shape: f32[2,8,32], index: 0, kind: input, shape index: {}]
  %s1 = inlined_call_operand.hbm [shape: f32[1,32], index: 1, kind: input, shape index: {}]
  %s2 = inlined_call_operand.hbm [shape: f32[1,32], index: 2, kind: input, shape index: {}]
  %s3 = inlined_call_operand.hbm [shape: bf16[32,96], index: 3, kind: input, shape index: {}]
  %s4 = inlined_call_operand.hbm [shape: f32[1,96], index: 4, kind: input, shape index: {}]
  %s5 = inlined_call_operand.hbm [shape: bf16[32,32], index: 5, kind: input, shape index: {}]
  %s6 = inlined_call_operand.hbm [shape: f32[1,32], index: 6, kind: input, shape index: {}]
  %s7 = inlined_call_operand.hbm [shape: f32[1,32], index: 7, kind: input, shape index: {}]
  %s8 = inlined_call_operand.hbm [shape: f32[1,32], index: 8, kind: input, shape index: {}]
  %s9 = inlined_call_operand.hbm [shape: bf16[32,128], index: 9, kind: input, shape index: {}]
  %s10 = inlined_call_operand.hbm [shape: f32[1,128], index: 10, kind: input, shape index: {}]
  %s11 = inlined_call_operand.hbm [shape: bf16[128,32], index: 11, kind: input, shape index: {}]
  %s12 = inlined_call_operand.hbm [shape: f32[1,32], index: 12, kind: input, shape index: {}]
  %s13 = inlined_call_operand.hbm [shape: f32[2,8,32], index: 13, kind: output, shape index: {}]
  %s14 = sld [smem:[#allocation0]]
  $region137: #{tpu_custom_call.1} parent=0
    _
  %s16 = ssub.s32 1, %s14
  %s17 = scalar_select 0, %s16, %s14
  $region1: #{tpu_custom_call.1} parent=0
    #allocation2 [shape = 'u8[8192]{0}', space=vmem, size = 0x2000, scoped, tag = 'input window, operand 0']
    #allocation3 [shape = 's32[2]{0}', space=sflag, size = 0x8, scoped, tag = 'scoped memory for tpu_custom_call.1']
    #allocation4 [shape = 's32[2]{0}', space=sflag, size = 0x8, scoped, tag = 'scoped memory for tpu_custom_call.1']
    #allocation5 [shape = 'u8[512]{0}', space=vmem, size = 0x400, scoped, tag = 'input window, operand 1, single buffered']
    #allocation6 [shape = 's32[1]{0}', space=sflag, size = 0x4, scoped, tag = 'scoped memory for tpu_custom_call.1']
    #allocation7 [shape = 'u8[512]{0}', space=vmem, size = 0x400, scoped, tag = 'input window, operand 2, single buffered']
    #allocation8 [shape = 'u8[8192]{0}', space=vmem, size = 0x2000, scoped, tag = 'input window, operand 3, single buffered']
    #allocation9 [shape = 's32[1]{0}', space=sflag, size = 0x4, scoped, tag = 'scoped memory for tpu_custom_call.1']
    #allocation10 [shape = 'u8[512]{0}', space=vmem, size = 0x400, scoped, tag = 'input window, operand 4, single buffered']
    #allocation11 [shape = 'u8[8192]{0}', space=vmem, size = 0x2000, scoped, tag = 'input window, operand 5, single buffered']
    #allocation12 [shape = 's32[1]{0}', space=sflag, size = 0x4, scoped, tag = 'scoped memory for tpu_custom_call.1']
    #allocation13 [shape = 'u8[512]{0}', space=vmem, size = 0x400, scoped, tag = 'input window, operand 6, single buffered']
    #allocation14 [shape = 'u8[512]{0}', space=vmem, size = 0x400, scoped, tag = 'input window, operand 7, single buffered']
    #allocation15 [shape = 's32[1]{0}', space=sflag, size = 0x4, scoped, tag = 'scoped memory for tpu_custom_call.1']
    #allocation16 [shape = 'u8[512]{0}', space=vmem, size = 0x400, scoped, tag = 'input window, operand 8, single buffered']
    #allocation17 [shape = 'u8[8192]{0}', space=vmem, size = 0x2000, scoped, tag = 'input window, operand 9, single buffered']
    #allocation18 [shape = 's32[1]{0}', space=sflag, size = 0x4, scoped, tag = 'scoped memory for tpu_custom_call.1']
    #allocation19 [shape = 'u8[512]{0}', space=vmem, size = 0x400, scoped, tag = 'input window, operand 10, single buffered']
    #allocation20 [shape = 'u8[32768]{0}', space=vmem, size = 0x8000, scoped, tag = 'input window, operand 11, single buffered']
    #allocation21 [shape = 's32[1]{0}', space=sflag, size = 0x4, scoped, tag = 'scoped memory for tpu_custom_call.1']
    #allocation22 [shape = 'u8[512]{0}', space=vmem, size = 0x400, scoped, tag = 'input window, operand 12, single buffered']
    #allocation23 [shape = 'u8[8192]{0}', space=vmem, size = 0x2000, scoped, tag = 'output window, operand 0']
    %18 = vsyncpa [#allocation3], 0
    %s19 = scalar_lea.sflag [#allocation3], 1
    %20 = vsyncpa %s19, 0
    %21 = vsyncpa [#allocation6], 0
    %22 = vsyncpa [#allocation9], 0
    %23 = vsyncpa [#allocation12], 0
    %24 = vsyncpa [#allocation15], 0
    %25 = vsyncpa [#allocation18], 0
    %26 = vsyncpa [#allocation21], 0
    %27 = vsyncpa [#allocation4], 0
    %s28 = scalar_lea.sflag [#allocation4], 1
    %29 = vsyncpa %s28, 0
    loop: start=0, step=1, limit=4
    $region2: #{tpu_custom_call.1} parent=1 // loop_pre_header
      _
    $region3: #{tpu_custom_call.1} parent=1 // loop_header
      %s31 = sphi 0, %s35
      %p32 = scmp.ge.s32.totalorder %s31, 4
      %s41 = sphi 0, %s43
      %s44 = sphi 0, %s41
      %s45 = sphi 0, %s44
      %s61 = sphi 0, %s45
      %s65 = sphi 0, %s65
      %s67 = sphi 0, %s65
      %s68 = sphi 0, %s67
      %s82 = sphi 0, %s68
      %s86 = sphi 0, %s86
      %s88 = sphi 0, %s86
      %s89 = sphi 0, %s88
      %s103 = sphi 0, %s89
      %s107 = sphi 0, %s107
      %s109 = sphi 0, %s107
      %s110 = sphi 0, %s109
      %s124 = sphi 0, %s110
      %s128 = sphi 0, %s128
      %s130 = sphi 0, %s128
      %s131 = sphi 0, %s130
      %s145 = sphi 0, %s131
      %s149 = sphi 0, %s149
      %s151 = sphi 0, %s149
      %s152 = sphi 0, %s151
      %s166 = sphi 0, %s152
      %s170 = sphi 0, %s170
      %s172 = sphi 0, %s170
      %s173 = sphi 0, %s172
      %s187 = sphi 0, %s173
      %s191 = sphi 0, %s191
      %s193 = sphi 0, %s191
      %s194 = sphi 0, %s193
      %s208 = sphi 0, %s194
      %s212 = sphi 0, %s212
      %s214 = sphi 0, %s212
      %s215 = sphi 0, %s214
      %s229 = sphi 0, %s215
      %s233 = sphi 0, %s233
      %s235 = sphi 0, %s233
      %s236 = sphi 0, %s235
      %s250 = sphi 0, %s236
      %s254 = sphi 0, %s254
      %s256 = sphi 0, %s254
      %s257 = sphi 0, %s256
      %s271 = sphi 0, %s257
      %s275 = sphi 0, %s275
      %s277 = sphi 0, %s275
      %s278 = sphi 0, %s277
      %s292 = sphi 0, %s278
      %s296 = sphi 0, %s296
      %s298 = sphi 0, %s296
      %s299 = sphi 0, %s298
      %s313 = sphi 0, %s299
      %s319 = sphi 0, %s321
      %s322 = sphi 0, %s319
      %s323 = sphi 0, %s322
      %s339 = sphi 0, %s323
    $region4: #{tpu_custom_call.1} parent=1 // loop_header_branch
      %34 = sbr.rel (%p32) target = $region8
    $region5: #{tpu_custom_call.1} parent=1 // loop_body
      %s36 = ssub.s32 %s31, 1
      %s37 = ssub.s32 %s31, 2
      %s38 = sadd.s32 %s31, 1
      %s39 = ssub.s32 %s31, %s38
      %p40 = scmp.eq.s32.totalorder %s39, 0
      %s42 = sadd.s32 %s41, 1
      %s43 = scalar_select %p40, %s41, %s42
      %p46 = pneg %p40
      %p47 = scmp.eq.s32.totalorder %s31, 1
      %p48 = por %p46, %p47
      %p49 = scmp.ne.s32.totalorder %s41, %s44
      %p50 = scmp.eq.s32.totalorder %s31, 0
      %p51 = por %p49, %p50
      %p52 = scmp.ne.s32.totalorder %s41, %s44
      %p53 = scmp.eq.s32.totalorder %s36, 1
      %p54 = por %p52, %p53
      %p55 = scmp.ne.s32.totalorder %s44, %s45
      %p56 = scmp.eq.s32.totalorder %s36, 0
      %p57 = por %p55, %p56
      %p58 = scmp.ne.s32.totalorder %s44, %s45
      %p59 = scmp.eq.s32.totalorder %s37, 1
      %p60 = por %p58, %p59
      %p62 = scmp.ne.s32.totalorder %s45, %s61
      %p63 = scmp.eq.s32.totalorder %s37, 0
      %p64 = por %p62, %p63
      %s66 = sadd.s32 %s65, 1
      %p69 = scmp.eq.s32.totalorder %s31, 1
      %p70 = scmp.ne.s32.totalorder %s65, %s67
      %p71 = scmp.eq.s32.totalorder %s31, 0
      %p72 = por %p70, %p71
      %p73 = scmp.ne.s32.totalorder %s65, %s67
      %p74 = scmp.eq.s32.totalorder %s36, 1
      %p75 = por %p73, %p74
      %p76 = scmp.ne.s32.totalorder %s67, %s68
      %p77 = scmp.eq.s32.totalorder %s36, 0
      %p78 = por %p76, %p77
      %p79 = scmp.ne.s32.totalorder %s67, %s68
      %p80 = scmp.eq.s32.totalorder %s37, 1
      %p81 = por %p79, %p80
      %p83 = scmp.ne.s32.totalorder %s68, %s82
      %p84 = scmp.eq.s32.totalorder %s37, 0
      %p85 = por %p83, %p84
      %s87 = sadd.s32 %s86, 1
      %p90 = scmp.eq.s32.totalorder %s31, 1
      %p91 = scmp.ne.s32.totalorder %s86, %s88
      %p92 = scmp.eq.s32.totalorder %s31, 0
      %p93 = por %p91, %p92
      %p94 = scmp.ne.s32.totalorder %s86, %s88
      %p95 = scmp.eq.s32.totalorder %s36, 1
      %p96 = por %p94, %p95
      %p97 = scmp.ne.s32.totalorder %s88, %s89
      %p98 = scmp.eq.s32.totalorder %s36, 0
      %p99 = por %p97, %p98
      %p100 = scmp.ne.s32.totalorder %s88, %s89
      %p101 = scmp.eq.s32.totalorder %s37, 1
      %p102 = por %p100, %p101
      %p104 = scmp.ne.s32.totalorder %s89, %s103
      %p105 = scmp.eq.s32.totalorder %s37, 0
      %p106 = por %p104, %p105
      %s108 = sadd.s32 %s107, 1
      %p111 = scmp.eq.s32.totalorder %s31, 1
      %p112 = scmp.ne.s32.totalorder %s107, %s109
      %p113 = scmp.eq.s32.totalorder %s31, 0
      %p114 = por %p112, %p113
      %p115 = scmp.ne.s32.totalorder %s107, %s109
      %p116 = scmp.eq.s32.totalorder %s36, 1
      %p117 = por %p115, %p116
      %p118 = scmp.ne.s32.totalorder %s109, %s110
      %p119 = scmp.eq.s32.totalorder %s36, 0
      %p120 = por %p118, %p119
      %p121 = scmp.ne.s32.totalorder %s109, %s110
      %p122 = scmp.eq.s32.totalorder %s37, 1
      %p123 = por %p121, %p122
      %p125 = scmp.ne.s32.totalorder %s110, %s124
      %p126 = scmp.eq.s32.totalorder %s37, 0
      %p127 = por %p125, %p126
      %s129 = sadd.s32 %s128, 1
      %p132 = scmp.eq.s32.totalorder %s31, 1
      %p133 = scmp.ne.s32.totalorder %s128, %s130
      %p134 = scmp.eq.s32.totalorder %s31, 0
      %p135 = por %p133, %p134
      %p136 = scmp.ne.s32.totalorder %s128, %s130
      %p137 = scmp.eq.s32.totalorder %s36, 1
      %p138 = por %p136, %p137
      %p139 = scmp.ne.s32.totalorder %s130, %s131
      %p140 = scmp.eq.s32.totalorder %s36, 0
      %p141 = por %p139, %p140
      %p142 = scmp.ne.s32.totalorder %s130, %s131
      %p143 = scmp.eq.s32.totalorder %s37, 1
      %p144 = por %p142, %p143
      %p146 = scmp.ne.s32.totalorder %s131, %s145
      %p147 = scmp.eq.s32.totalorder %s37, 0
      %p148 = por %p146, %p147
      %s150 = sadd.s32 %s149, 1
      %p153 = scmp.eq.s32.totalorder %s31, 1
      %p154 = scmp.ne.s32.totalorder %s149, %s151
      %p155 = scmp.eq.s32.totalorder %s31, 0
      %p156 = por %p154, %p155
      %p157 = scmp.ne.s32.totalorder %s149, %s151
      %p158 = scmp.eq.s32.totalorder %s36, 1
      %p159 = por %p157, %p158
      %p160 = scmp.ne.s32.totalorder %s151, %s152
      %p161 = scmp.eq.s32.totalorder %s36, 0
      %p162 = por %p160, %p161
      %p163 = scmp.ne.s32.totalorder %s151, %s152
      %p164 = scmp.eq.s32.totalorder %s37, 1
      %p165 = por %p163, %p164
      %p167 = scmp.ne.s32.totalorder %s152, %s166
      %p168 = scmp.eq.s32.totalorder %s37, 0
      %p169 = por %p167, %p168
      %s171 = sadd.s32 %s170, 1
      %p174 = scmp.eq.s32.totalorder %s31, 1
      %p175 = scmp.ne.s32.totalorder %s170, %s172
      %p176 = scmp.eq.s32.totalorder %s31, 0
      %p177 = por %p175, %p176
      %p178 = scmp.ne.s32.totalorder %s170, %s172
      %p179 = scmp.eq.s32.totalorder %s36, 1
      %p180 = por %p178, %p179
      %p181 = scmp.ne.s32.totalorder %s172, %s173
      %p182 = scmp.eq.s32.totalorder %s36, 0
      %p183 = por %p181, %p182
      %p184 = scmp.ne.s32.totalorder %s172, %s173
      %p185 = scmp.eq.s32.totalorder %s37, 1
      %p186 = por %p184, %p185
      %p188 = scmp.ne.s32.totalorder %s173, %s187
      %p189 = scmp.eq.s32.totalorder %s37, 0
      %p190 = por %p188, %p189
      %s192 = sadd.s32 %s191, 1
      %p195 = scmp.eq.s32.totalorder %s31, 1
      %p196 = scmp.ne.s32.totalorder %s191, %s193
      %p197 = scmp.eq.s32.totalorder %s31, 0
      %p198 = por %p196, %p197
      %p199 = scmp.ne.s32.totalorder %s191, %s193
      %p200 = scmp.eq.s32.totalorder %s36, 1
      %p201 = por %p199, %p200
      %p202 = scmp.ne.s32.totalorder %s193, %s194
      %p203 = scmp.eq.s32.totalorder %s36, 0
      %p204 = por %p202, %p203
      %p205 = scmp.ne.s32.totalorder %s193, %s194
      %p206 = scmp.eq.s32.totalorder %s37, 1
      %p207 = por %p205, %p206
      %p209 = scmp.ne.s32.totalorder %s194, %s208
      %p210 = scmp.eq.s32.totalorder %s37, 0
      %p211 = por %p209, %p210
      %s213 = sadd.s32 %s212, 1
      %p216 = scmp.eq.s32.totalorder %s31, 1
      %p217 = scmp.ne.s32.totalorder %s212, %s214
      %p218 = scmp.eq.s32.totalorder %s31, 0
      %p219 = por %p217, %p218
      %p220 = scmp.ne.s32.totalorder %s212, %s214
      %p221 = scmp.eq.s32.totalorder %s36, 1
      %p222 = por %p220, %p221
      %p223 = scmp.ne.s32.totalorder %s214, %s215
      %p224 = scmp.eq.s32.totalorder %s36, 0
      %p225 = por %p223, %p224
      %p226 = scmp.ne.s32.totalorder %s214, %s215
      %p227 = scmp.eq.s32.totalorder %s37, 1
      %p228 = por %p226, %p227
      %p230 = scmp.ne.s32.totalorder %s215, %s229
      %p231 = scmp.eq.s32.totalorder %s37, 0
      %p232 = por %p230, %p231
      %s234 = sadd.s32 %s233, 1
      %p237 = scmp.eq.s32.totalorder %s31, 1
      %p238 = scmp.ne.s32.totalorder %s233, %s235
      %p239 = scmp.eq.s32.totalorder %s31, 0
      %p240 = por %p238, %p239
      %p241 = scmp.ne.s32.totalorder %s233, %s235
      %p242 = scmp.eq.s32.totalorder %s36, 1
      %p243 = por %p241, %p242
      %p244 = scmp.ne.s32.totalorder %s235, %s236
      %p245 = scmp.eq.s32.totalorder %s36, 0
      %p246 = por %p244, %p245
      %p247 = scmp.ne.s32.totalorder %s235, %s236
      %p248 = scmp.eq.s32.totalorder %s37, 1
      %p249 = por %p247, %p248
      %p251 = scmp.ne.s32.totalorder %s236, %s250
      %p252 = scmp.eq.s32.totalorder %s37, 0
      %p253 = por %p251, %p252
      %s255 = sadd.s32 %s254, 1
      %p258 = scmp.eq.s32.totalorder %s31, 1
      %p259 = scmp.ne.s32.totalorder %s254, %s256
      %p260 = scmp.eq.s32.totalorder %s31, 0
      %p261 = por %p259, %p260
      %p262 = scmp.ne.s32.totalorder %s254, %s256
      %p263 = scmp.eq.s32.totalorder %s36, 1
      %p264 = por %p262, %p263
      %p265 = scmp.ne.s32.totalorder %s256, %s257
      %p266 = scmp.eq.s32.totalorder %s36, 0
      %p267 = por %p265, %p266
      %p268 = scmp.ne.s32.totalorder %s256, %s257
      %p269 = scmp.eq.s32.totalorder %s37, 1
      %p270 = por %p268, %p269
      %p272 = scmp.ne.s32.totalorder %s257, %s271
      %p273 = scmp.eq.s32.totalorder %s37, 0
      %p274 = por %p272, %p273
      %s276 = sadd.s32 %s275, 1
      %p279 = scmp.eq.s32.totalorder %s31, 1
      %p280 = scmp.ne.s32.totalorder %s275, %s277
      %p281 = scmp.eq.s32.totalorder %s31, 0
      %p282 = por %p280, %p281
      %p283 = scmp.ne.s32.totalorder %s275, %s277
      %p284 = scmp.eq.s32.totalorder %s36, 1
      %p285 = por %p283, %p284
      %p286 = scmp.ne.s32.totalorder %s277, %s278
      %p287 = scmp.eq.s32.totalorder %s36, 0
      %p288 = por %p286, %p287
      %p289 = scmp.ne.s32.totalorder %s277, %s278
      %p290 = scmp.eq.s32.totalorder %s37, 1
      %p291 = por %p289, %p290
      %p293 = scmp.ne.s32.totalorder %s278, %s292
      %p294 = scmp.eq.s32.totalorder %s37, 0
      %p295 = por %p293, %p294
      %s297 = sadd.s32 %s296, 1
      %p300 = scmp.eq.s32.totalorder %s31, 1
      %p301 = scmp.ne.s32.totalorder %s296, %s298
      %p302 = scmp.eq.s32.totalorder %s31, 0
      %p303 = por %p301, %p302
      %p304 = scmp.ne.s32.totalorder %s296, %s298
      %p305 = scmp.eq.s32.totalorder %s36, 1
      %p306 = por %p304, %p305
      %p307 = scmp.ne.s32.totalorder %s298, %s299
      %p308 = scmp.eq.s32.totalorder %s36, 0
      %p309 = por %p307, %p308
      %p310 = scmp.ne.s32.totalorder %s298, %s299
      %p311 = scmp.eq.s32.totalorder %s37, 1
      %p312 = por %p310, %p311
      %p314 = scmp.ne.s32.totalorder %s299, %s313
      %p315 = scmp.eq.s32.totalorder %s37, 0
      %p316 = por %p314, %p315
      %s317 = ssub.s32 %s31, %s38
      %p318 = scmp.eq.s32.totalorder %s317, 0
      %s320 = sadd.s32 %s319, 1
      %s321 = scalar_select %p318, %s319, %s320
      %p324 = pneg %p318
      %p325 = scmp.eq.s32.totalorder %s31, 1
      %p326 = por %p324, %p325
      %p327 = scmp.ne.s32.totalorder %s319, %s322
      %p328 = scmp.eq.s32.totalorder %s31, 0
      %p329 = por %p327, %p328
      %p330 = scmp.ne.s32.totalorder %s319, %s322
      %p331 = scmp.eq.s32.totalorder %s36, 1
      %p332 = por %p330, %p331
      %p333 = scmp.ne.s32.totalorder %s322, %s323
      %p334 = scmp.eq.s32.totalorder %s36, 0
      %p335 = por %p333, %p334
      %p336 = scmp.ne.s32.totalorder %s322, %s323
      %p337 = scmp.eq.s32.totalorder %s37, 1
      %p338 = por %p336, %p337
      %p340 = scmp.ne.s32.totalorder %s323, %s339
      %p341 = scmp.eq.s32.totalorder %s37, 0
      %p342 = por %p340, %p341
      %p343 = scmp.le.s32.totalorder 1, %s31
      %p344 = scmp.lt.s32.totalorder %s31, 3
      %p345 = pnand %p343, %p344
      %p346 = pneg %p345
      // Predicated region
      $region9: #{tpu_custom_call.1} parent=5 // pred_check
        _
      $region10: #{tpu_custom_call.1} parent=5 // pred_check_branch
        %348 = sbr.rel (%p345) target = $region12
      $region11: #{tpu_custom_call.1} parent=5 // pred_region
        %s349 = ssub.s32 %s31, 1
        // Predicated region
        $region13: #{tpu_custom_call.1} parent=11 // pred_check
          %p350 = pneg %p78
        $region14: #{tpu_custom_call.1} parent=11 // pred_check_branch
          %352 = sbr.rel (%p350) target = $region16
        $region15: #{tpu_custom_call.1} parent=11 // pred_region
          %s354 = ssub.s32 16, 16
          %355 = vsyncadd [#allocation6], %s354
          %s357 = sshll.u32 [#allocation5], 4
          %s358 = int_to_ptr.vmem [resolvable:$true] %s357
          %360 = dma.hbm_to_vmem [thread:$0]  %s1, 16, %s358, [#allocation6]
        $region16: #{tpu_custom_call.1} parent=11 // pred_fallthru
          _
        // Predicated region
        $region17: #{tpu_custom_call.1} parent=11 // pred_check
          %p361 = pneg %p99
        $region18: #{tpu_custom_call.1} parent=11 // pred_check_branch
          %363 = sbr.rel (%p361) target = $region20
        $region19: #{tpu_custom_call.1} parent=11 // pred_region
          %s365 = ssub.s32 16, 16
          %366 = vsyncadd [#allocation6], %s365
          %s368 = sshll.u32 [#allocation7], 4
          %s369 = int_to_ptr.vmem [resolvable:$true] %s368
          %371 = dma.hbm_to_vmem [thread:$0]  %s2, 16, %s369, [#allocation6]
        $region20: #{tpu_custom_call.1} parent=11 // pred_fallthru
          _
        // Predicated region
        $region21: #{tpu_custom_call.1} parent=11 // pred_check
          %p372 = pneg %p120
        $region22: #{tpu_custom_call.1} parent=11 // pred_check_branch
          %374 = sbr.rel (%p372) target = $region24
        $region23: #{tpu_custom_call.1} parent=11 // pred_region
          %s376 = ssub.s32 256, 256
          %377 = vsyncadd [#allocation9], %s376
          %s378 = sshll.u32 [#allocation8], 4
          %s379 = int_to_ptr.vmem [resolvable:$true] %s378
          %384 = dma.hbm_to_vmem [thread:$0]  %s3, 256, %s379, [#allocation9], 64, 64, 4
        $region24: #{tpu_custom_call.1} parent=11 // pred_fallthru
          _
        // Predicated region
        $region25: #{tpu_custom_call.1} parent=11 // pred_check
          %p385 = pneg %p141
        $region26: #{tpu_custom_call.1} parent=11 // pred_check_branch
          %387 = sbr.rel (%p385) target = $region28
        $region27: #{tpu_custom_call.1} parent=11 // pred_region
          %s389 = ssub.s32 16, 16
          %390 = vsyncadd [#allocation9], %s389
          %s392 = sshll.u32 [#allocation10], 4
          %s393 = int_to_ptr.vmem [resolvable:$true] %s392
          %395 = dma.hbm_to_vmem [thread:$0]  %s4, 16, %s393, [#allocation9]
        $region28: #{tpu_custom_call.1} parent=11 // pred_fallthru
          _
        // Predicated region
        $region29: #{tpu_custom_call.1} parent=11 // pred_check
          %p396 = pneg %p162
        $region30: #{tpu_custom_call.1} parent=11 // pred_check_branch
          %398 = sbr.rel (%p396) target = $region32
        $region31: #{tpu_custom_call.1} parent=11 // pred_region
          %s400 = ssub.s32 256, 256
          %401 = vsyncadd [#allocation12], %s400
          %s402 = sshll.u32 [#allocation11], 4
          %s403 = int_to_ptr.vmem [resolvable:$true] %s402
          %408 = dma.hbm_to_vmem [thread:$0]  %s5, 256, %s403, [#allocation12], 64, 64, 4
        $region32: #{tpu_custom_call.1} parent=11 // pred_fallthru
          _
        // Predicated region
        $region33: #{tpu_custom_call.1} parent=11 // pred_check
          %p409 = pneg %p183
        $region34: #{tpu_custom_call.1} parent=11 // pred_check_branch
          %411 = sbr.rel (%p409) target = $region36
        $region35: #{tpu_custom_call.1} parent=11 // pred_region
          %s413 = ssub.s32 16, 16
          %414 = vsyncadd [#allocation12], %s413
          %s416 = sshll.u32 [#allocation13], 4
          %s417 = int_to_ptr.vmem [resolvable:$true] %s416
          %419 = dma.hbm_to_vmem [thread:$0]  %s6, 16, %s417, [#allocation12]
        $region36: #{tpu_custom_call.1} parent=11 // pred_fallthru
          _
        // Predicated region
        $region37: #{tpu_custom_call.1} parent=11 // pred_check
          %p420 = pneg %p204
        $region38: #{tpu_custom_call.1} parent=11 // pred_check_branch
          %422 = sbr.rel (%p420) target = $region40
        $region39: #{tpu_custom_call.1} parent=11 // pred_region
          %s424 = ssub.s32 16, 16
          %425 = vsyncadd [#allocation15], %s424
          %s427 = sshll.u32 [#allocation14], 4
          %s428 = int_to_ptr.vmem [resolvable:$true] %s427
          %430 = dma.hbm_to_vmem [thread:$0]  %s7, 16, %s428, [#allocation15]
        $region40: #{tpu_custom_call.1} parent=11 // pred_fallthru
          _
        // Predicated region
        $region41: #{tpu_custom_call.1} parent=11 // pred_check
          %p431 = pneg %p225
        $region42: #{tpu_custom_call.1} parent=11 // pred_check_branch
          %433 = sbr.rel (%p431) target = $region44
        $region43: #{tpu_custom_call.1} parent=11 // pred_region
          %s435 = ssub.s32 16, 16
          %436 = vsyncadd [#allocation15], %s435
          %s438 = sshll.u32 [#allocation16], 4
          %s439 = int_to_ptr.vmem [resolvable:$true] %s438
          %441 = dma.hbm_to_vmem [thread:$0]  %s8, 16, %s439, [#allocation15]
        $region44: #{tpu_custom_call.1} parent=11 // pred_fallthru
          _
        // Predicated region
        $region45: #{tpu_custom_call.1} parent=11 // pred_check
          %p442 = pneg %p246
        $region46: #{tpu_custom_call.1} parent=11 // pred_check_branch
          %444 = sbr.rel (%p442) target = $region48
        $region47: #{tpu_custom_call.1} parent=11 // pred_region
          %s446 = ssub.s32 256, 256
          %447 = vsyncadd [#allocation18], %s446
          %s448 = sshll.u32 [#allocation17], 4
          %s449 = int_to_ptr.vmem [resolvable:$true] %s448
          %454 = dma.hbm_to_vmem [thread:$0]  %s9, 256, %s449, [#allocation18], 64, 64, 4
        $region48: #{tpu_custom_call.1} parent=11 // pred_fallthru
          _
        // Predicated region
        $region49: #{tpu_custom_call.1} parent=11 // pred_check
          %p455 = pneg %p267
        $region50: #{tpu_custom_call.1} parent=11 // pred_check_branch
          %457 = sbr.rel (%p455) target = $region52
        $region51: #{tpu_custom_call.1} parent=11 // pred_region
          %s459 = ssub.s32 16, 16
          %460 = vsyncadd [#allocation18], %s459
          %s462 = sshll.u32 [#allocation19], 4
          %s463 = int_to_ptr.vmem [resolvable:$true] %s462
          %465 = dma.hbm_to_vmem [thread:$0]  %s10, 16, %s463, [#allocation18]
        $region52: #{tpu_custom_call.1} parent=11 // pred_fallthru
          _
        // Predicated region
        $region53: #{tpu_custom_call.1} parent=11 // pred_check
          %p466 = pneg %p288
        $region54: #{tpu_custom_call.1} parent=11 // pred_check_branch
          %468 = sbr.rel (%p466) target = $region56
        $region55: #{tpu_custom_call.1} parent=11 // pred_region
          %s470 = ssub.s32 1024, 1024
          %471 = vsyncadd [#allocation21], %s470
          %s472 = sshll.u32 [#allocation20], 4
          %s473 = int_to_ptr.vmem [resolvable:$true] %s472
          %478 = dma.hbm_to_vmem [thread:$0]  %s11, 1024, %s473, [#allocation21], 64, 64, 4
        $region56: #{tpu_custom_call.1} parent=11 // pred_fallthru
          _
        // Predicated region
        $region57: #{tpu_custom_call.1} parent=11 // pred_check
          %p479 = pneg %p309
        $region58: #{tpu_custom_call.1} parent=11 // pred_check_branch
          %481 = sbr.rel (%p479) target = $region60
        $region59: #{tpu_custom_call.1} parent=11 // pred_region
          %s483 = ssub.s32 16, 16
          %484 = vsyncadd [#allocation21], %s483
          %s486 = sshll.u32 [#allocation22], 4
          %s487 = int_to_ptr.vmem [resolvable:$true] %s486
          %489 = dma.hbm_to_vmem [thread:$0]  %s12, 16, %s487, [#allocation21]
        $region60: #{tpu_custom_call.1} parent=11 // pred_fallthru
          _
      $region12: #{tpu_custom_call.1} parent=5 // pred_fallthru
        _
      %p490 = scmp.lt.s32.totalorder %s31, 2
      // Predicated region
      $region61: #{tpu_custom_call.1} parent=5 // pred_check
        %p491 = pneg %p490
      $region62: #{tpu_custom_call.1} parent=5 // pred_check_branch
        %493 = sbr.rel (%p491) target = $region64
      $region63: #{tpu_custom_call.1} parent=5 // pred_region
        // Predicated region
        $region65: #{tpu_custom_call.1} parent=63 // pred_check
          %p494 = pneg %p51
        $region66: #{tpu_custom_call.1} parent=63 // pred_check_branch
          %496 = sbr.rel (%p494) target = $region68
        $region67: #{tpu_custom_call.1} parent=63 // pred_region
          %s497 = sand.u32 %s41, 1
          %s498 = scalar_lea.sflag [#allocation3], %s497
          %s499 = sand.u32 %s41, 1
          %s500 = smul.addr %s499, 8
          %s501 = scalar_lea.vmem [#allocation2], %s500
          %s503 = ssub.s32 128, 128
          %504 = vsyncadd %s498, %s503
          %s505 = smul.addr %s31, 128
          %s506 = scalar_lea.hbm %s0, %s505
          %s508 = sshll.u32 %s501, 4
          %s509 = int_to_ptr.vmem [resolvable:$true] %s508
          %511 = dma.hbm_to_vmem [thread:$0]  %s506, 128, %s509, %s498
        $region68: #{tpu_custom_call.1} parent=63 // pred_fallthru
          _
      $region64: #{tpu_custom_call.1} parent=5 // pred_fallthru
        _
      %p512 = scmp.le.s32.totalorder 1, %s31
      %p513 = scmp.lt.s32.totalorder %s31, 3
      %p514 = pnand %p512, %p513
      %p515 = pneg %p514
      // Predicated region
      $region69: #{tpu_custom_call.1} parent=5 // pred_check
        _
      $region70: #{tpu_custom_call.1} parent=5 // pred_check_branch
        %517 = sbr.rel (%p514) target = $region72
      $region71: #{tpu_custom_call.1} parent=5 // pred_region
        %s518 = ssub.s32 %s31, 1
        %s519 = sand.u32 %s44, 1
        %s520 = scalar_lea.sflag [#allocation3], %s519
        %s521 = sand.u32 %s44, 1
        %s522 = smul.addr %s521, 8
        %s523 = scalar_lea.vmem [#allocation2], %s522
        // Predicated region
        $region73: #{tpu_custom_call.1} parent=71 // pred_check
          %p524 = pneg %p57
        $region74: #{tpu_custom_call.1} parent=71 // pred_check_branch
          %526 = sbr.rel (%p524) target = $region76
        $region75: #{tpu_custom_call.1} parent=71 // pred_region
          %527 = dma.done %s520, 128
        $region76: #{tpu_custom_call.1} parent=71 // pred_fallthru
          _
        // Predicated region
        $region77: #{tpu_custom_call.1} parent=71 // pred_check
          %p528 = pneg %p78
        $region78: #{tpu_custom_call.1} parent=71 // pred_check_branch
          %530 = sbr.rel (%p528) target = $region80
        $region79: #{tpu_custom_call.1} parent=71 // pred_region
          %531 = dma.done [#allocation6], 16
        $region80: #{tpu_custom_call.1} parent=71 // pred_fallthru
          _
        // Predicated region
        $region81: #{tpu_custom_call.1} parent=71 // pred_check
          %p532 = pneg %p99
        $region82: #{tpu_custom_call.1} parent=71 // pred_check_branch
          %534 = sbr.rel (%p532) target = $region84
        $region83: #{tpu_custom_call.1} parent=71 // pred_region
          %535 = dma.done [#allocation6], 16
        $region84: #{tpu_custom_call.1} parent=71 // pred_fallthru
          _
        // Predicated region
        $region85: #{tpu_custom_call.1} parent=71 // pred_check
          %p536 = pneg %p120
        $region86: #{tpu_custom_call.1} parent=71 // pred_check_branch
          %538 = sbr.rel (%p536) target = $region88
        $region87: #{tpu_custom_call.1} parent=71 // pred_region
          %539 = dma.done [#allocation9], 256
        $region88: #{tpu_custom_call.1} parent=71 // pred_fallthru
          _
        // Predicated region
        $region89: #{tpu_custom_call.1} parent=71 // pred_check
          %p540 = pneg %p141
        $region90: #{tpu_custom_call.1} parent=71 // pred_check_branch
          %542 = sbr.rel (%p540) target = $region92
        $region91: #{tpu_custom_call.1} parent=71 // pred_region
          %543 = dma.done [#allocation9], 16
        $region92: #{tpu_custom_call.1} parent=71 // pred_fallthru
          _
        // Predicated region
        $region93: #{tpu_custom_call.1} parent=71 // pred_check
          %p544 = pneg %p162
        $region94: #{tpu_custom_call.1} parent=71 // pred_check_branch
          %546 = sbr.rel (%p544) target = $region96
        $region95: #{tpu_custom_call.1} parent=71 // pred_region
          %547 = dma.done [#allocation12], 256
        $region96: #{tpu_custom_call.1} parent=71 // pred_fallthru
          _
        // Predicated region
        $region97: #{tpu_custom_call.1} parent=71 // pred_check
          %p548 = pneg %p183
        $region98: #{tpu_custom_call.1} parent=71 // pred_check_branch
          %550 = sbr.rel (%p548) target = $region100
        $region99: #{tpu_custom_call.1} parent=71 // pred_region
          %551 = dma.done [#allocation12], 16
        $region100: #{tpu_custom_call.1} parent=71 // pred_fallthru
          _
        // Predicated region
        $region101: #{tpu_custom_call.1} parent=71 // pred_check
          %p552 = pneg %p204
        $region102: #{tpu_custom_call.1} parent=71 // pred_check_branch
          %554 = sbr.rel (%p552) target = $region104
        $region103: #{tpu_custom_call.1} parent=71 // pred_region
          %555 = dma.done [#allocation15], 16
        $region104: #{tpu_custom_call.1} parent=71 // pred_fallthru
          _
        // Predicated region
        $region105: #{tpu_custom_call.1} parent=71 // pred_check
          %p556 = pneg %p225
        $region106: #{tpu_custom_call.1} parent=71 // pred_check_branch
          %558 = sbr.rel (%p556) target = $region108
        $region107: #{tpu_custom_call.1} parent=71 // pred_region
          %559 = dma.done [#allocation15], 16
        $region108: #{tpu_custom_call.1} parent=71 // pred_fallthru
          _
        // Predicated region
        $region109: #{tpu_custom_call.1} parent=71 // pred_check
          %p560 = pneg %p246
        $region110: #{tpu_custom_call.1} parent=71 // pred_check_branch
          %562 = sbr.rel (%p560) target = $region112
        $region111: #{tpu_custom_call.1} parent=71 // pred_region
          %563 = dma.done [#allocation18], 256
        $region112: #{tpu_custom_call.1} parent=71 // pred_fallthru
          _
        // Predicated region
        $region113: #{tpu_custom_call.1} parent=71 // pred_check
          %p564 = pneg %p267
        $region114: #{tpu_custom_call.1} parent=71 // pred_check_branch
          %566 = sbr.rel (%p564) target = $region116
        $region115: #{tpu_custom_call.1} parent=71 // pred_region
          %567 = dma.done [#allocation18], 16
        $region116: #{tpu_custom_call.1} parent=71 // pred_fallthru
          _
        // Predicated region
        $region117: #{tpu_custom_call.1} parent=71 // pred_check
          %p568 = pneg %p288
        $region118: #{tpu_custom_call.1} parent=71 // pred_check_branch
          %570 = sbr.rel (%p568) target = $region120
        $region119: #{tpu_custom_call.1} parent=71 // pred_region
          %571 = dma.done [#allocation21], 1024
        $region120: #{tpu_custom_call.1} parent=71 // pred_fallthru
          _
        // Predicated region
        $region121: #{tpu_custom_call.1} parent=71 // pred_check
          %p572 = pneg %p309
        $region122: #{tpu_custom_call.1} parent=71 // pred_check_branch
          %574 = sbr.rel (%p572) target = $region124
        $region123: #{tpu_custom_call.1} parent=71 // pred_region
          %575 = dma.done [#allocation21], 16
        $region124: #{tpu_custom_call.1} parent=71 // pred_fallthru
          _
        %s576 = sand.u32 %s44, 1
        %s577 = scalar_lea.sflag [#allocation3], %s576
        %s578 = sand.u32 %s44, 1
        %s579 = smul.addr %s578, 8
        %s580 = scalar_lea.vmem [#allocation2], %s579
        %p581 = pneg %p57
        %p582 = pneg %p54
        %p583 = pneg %p78
        %p584 = pneg %p75
        %p585 = pneg %p99
        %p586 = pneg %p96
        %p587 = pneg %p120
        %p588 = pneg %p117
        %p589 = pneg %p141
        %p590 = pneg %p138
        %p591 = pneg %p162
        %p592 = pneg %p159
        %p593 = pneg %p183
        %p594 = pneg %p180
        %p595 = pneg %p204
        %p596 = pneg %p201
        %p597 = pneg %p225
        %p598 = pneg %p222
        %p599 = pneg %p246
        %p600 = pneg %p243
        %p601 = pneg %p267
        %p602 = pneg %p264
        %p603 = pneg %p288
        %p604 = pneg %p285
        %p605 = pneg %p309
        %p606 = pneg %p306
        %p607 = pneg %p335
        %p608 = pneg %p332
        %s609 = sand.u32 %s322, 1
        %s610 = scalar_lea.sflag [#allocation4], %s609
        %s611 = sand.u32 %s322, 1
        %s612 = smul.addr %s611, 8
        %s613 = scalar_lea.vmem [#allocation23], %s612
        %v615 = vld [vmem:[%s523] sm:$0xff]
        %v616 = vld [vmem:[#allocation5] sm:$0x1]
        %v617 = vld [vmem:[#allocation7] sm:$0x1]
        %vm618 = vcmask 261120
        %v619 = vsel %vm618, %v615, 0.0
        %620 = vadd.xlane.f32.xlu0 %v619
        %v621 = vpop.xlane.xlu0 %620
        %v622 = vrcp.pop 32.0
        %v623 = vmul.f32 %v621, %v622
        %v624 = vsub.f32 %v615, %v623
        %v625 = vmul.f32 %v624, %v624
        %v626 = vsel %vm618, %v625, 0.0
        %627 = vadd.xlane.f32.xlu0 %v626
        %v628 = vpop.xlane.xlu0 %627
        %v629 = vmul.f32 %v628, %v622
        %v630 = vadd.f32 %v629, 1e-05
        %v631 = vrsqrt.pop %v630
        %v632 = vmul.f32 %v624, %v631
        %v634 = vlaneseq
        %v635 = vshrl.u32 %v634, 7
        %v636 = vsub.s32 0, %v635
        %v637 = vrot.slane %v616, %v636
        %v639 = vmul.f32 %v632, %v637
        %v641 = vlaneseq
        %v642 = vshrl.u32 %v641, 7
        %v643 = vsub.s32 0, %v642
        %v644 = vrot.slane %v617, %v643
        %v646 = vadd.f32 %v639, %v644
        %v647 = vpack.c.bf16 %v646, %v646
        %v648 = vld [vmem:[#allocation8] sm:$0xf]
        %v649 = vld [vmem:[#allocation8 + $0x4] sm:$0xf]
        %v650 = vld [vmem:[#allocation8 + $0x8] sm:$0xf]
        %v651 = vld [vmem:[#allocation8 + $0xc] sm:$0xf]
        %v652 = vld [vmem:[#allocation10] sm:$0x1]
        %v654 = vlaneseq
        %v655 = vshrl.u32 %v654, 7
        %v656 = vsub.s32 0, %v655
        %v657 = vrot.slane %v652, %v656
        %v663 = vunpack.c.l.b16 %v648
        %v664 = vunpack.c.l.b16 %v649
        %v665 = vunpack.c.l.b16 %v650
        %v666 = vunpack.c.l.b16 %v651
        %v667 = vpack.c.b16 %v664, %v663
        %v668 = vpack.c.b16 %v666, %v665
        %v672 = vsel %vm618, %v647, 0
        %674 = vmatprep.subr.bf16.mxu0 0
        %675 = vmatpush1.bf16.msra.mxu0 %v667
        %676 = vmatprep.subr.bf16.mxu0 0
        %677 = vmatpush1.bf16.msra.mxu0 %v668
        %678 = vmatprep.subr.bf16.mxu0 0
        %679 = vmatpush1.bf16.msra.mxu0 0
        %680 = vmatprep.subr.bf16.mxu0 0
        %681 = vmatpush1.bf16.msra.mxu0 0
        %682 = vmatprep.subr.bf16.mxu0 0
        %683 = vmatpush1.bf16.msra.mxu0 0
        %684 = vmatprep.subr.bf16.mxu0 0
        %685 = vmatpush1.bf16.msra.mxu0 0
        %686 = vmatprep.subr.bf16.mxu0 0
        %687 = vmatpush1.bf16.msra.mxu0 0
        %688 = vmatprep.subr.bf16.mxu0 0
        %689 = vmatpush1.bf16.msra.mxu0 0
        %690 = vmatprep.subr.bf16.mxu0 0
        %691 = vmatpush1.bf16.msra.mxu0 0
        %692 = vmatprep.subr.bf16.mxu0 0
        %693 = vmatpush1.bf16.msra.mxu0 0
        %694 = vmatprep.subr.bf16.mxu0 0
        %695 = vmatpush1.bf16.msra.mxu0 0
        %696 = vmatprep.subr.bf16.mxu0 0
        %697 = vmatpush1.bf16.msra.mxu0 0
        %698 = vmatprep.subr.bf16.mxu0 0
        %699 = vmatpush1.bf16.msra.mxu0 0
        %700 = vmatprep.subr.bf16.mxu0 0
        %701 = vmatpush1.bf16.msra.mxu0 0
        %702 = vmatprep.subr.bf16.mxu0 0
        %703 = vmatpush1.bf16.msra.mxu0 0
        %704 = vmatprep.subr.bf16.mxu0 0
        %705 = vmatpush1.bf16.msra.mxu0 0
        %706 = vmatprep.mubr.bf16.mxu0 0
        %707 = vmatmul.mubr.bf16.gmra.mrb[0].mxu0 %v672
        %v708 = vpop.f32.mrb[0].mxu0
        %v709 = vadd.f32 %v657, %v708
        %v710 = vpop.f32.mrb[0].mxu0
        %v711 = vpop.f32.mrb[0].mxu0
        %v712 = vpop.f32.mrb[0].mxu0
        %713 = vdwg.mxu0
        %v714 = vpack.c.bf16 %v709, %v709
        %716 = vrot.lane.b32.xlu0 %v714, 112
        %v717 = vpop.permute.xlu0 %716
        %v718 = vlaneseq
        %v719 = vshrl.u32 %v718, 7
        %v720 = vlaneseq
        %v721 = vand.u32 %v720, 127
        %722 = vrot.lane.b32.xlu0 %v714, 96
        %v723 = vpop.permute.xlu0 %722
        %vm724 = vcmask 130048
        %v726 = vsel %vm724, %v714, 0
        %v729 = vsel %vm724, %v723, 0
        %731 = vmatprep.subr.bf16.mxu0 0
        %732 = vmatpush1.bf16.xpose.msra.mxu0 %v729
        %733 = vmatprep.subr.bf16.mxu0 0
        %734 = vmatpush1.bf16.xpose.msra.mxu0 0
        %735 = vmatprep.subr.bf16.mxu0 0
        %736 = vmatpush1.bf16.xpose.msra.mxu0 0
        %737 = vmatprep.subr.bf16.mxu0 0
        %738 = vmatpush1.bf16.xpose.msra.mxu0 0
        %739 = vmatprep.subr.bf16.mxu0 0
        %740 = vmatpush1.bf16.xpose.msra.mxu0 0
        %741 = vmatprep.subr.bf16.mxu0 0
        %742 = vmatpush1.bf16.xpose.msra.mxu0 0
        %743 = vmatprep.subr.bf16.mxu0 0
        %744 = vmatpush1.bf16.xpose.msra.mxu0 0
        %745 = vmatprep.subr.bf16.mxu0 0
        %746 = vmatpush1.bf16.xpose.msra.mxu0 0
        %747 = vmatprep.subr.bf16.mxu0 0
        %748 = vmatpush1.bf16.xpose.msra.mxu0 0
        %749 = vmatprep.subr.bf16.mxu0 0
        %750 = vmatpush1.bf16.xpose.msra.mxu0 0
        %751 = vmatprep.subr.bf16.mxu0 0
        %752 = vmatpush1.bf16.xpose.msra.mxu0 0
        %753 = vmatprep.subr.bf16.mxu0 0
        %754 = vmatpush1.bf16.xpose.msra.mxu0 0
        %755 = vmatprep.subr.bf16.mxu0 0
        %756 = vmatpush1.bf16.xpose.msra.mxu0 0
        %757 = vmatprep.subr.bf16.mxu0 0
        %758 = vmatpush1.bf16.xpose.msra.mxu0 0
        %759 = vmatprep.subr.bf16.mxu0 0
        %760 = vmatpush1.bf16.xpose.msra.mxu0 0
        %761 = vmatprep.subr.bf16.mxu0 0
        %762 = vmatpush1.bf16.xpose.msra.mxu0 0
        %763 = vmatprep.mubr.bf16.mxu0 0
        %764 = vmatmul.mubr.bf16.gmra.mrb[0].mxu0 %v726
        %v765 = vpop.f32.mrb[0].mxu0
        %v766 = vadd.f32 0.0, %v765
        %v767 = vpop.f32.mrb[0].mxu0
        %v768 = vpop.f32.mrb[0].mxu0
        %v769 = vpop.f32.mrb[0].mxu0
        %770 = vdwg.mxu0
        %771 = vrot.lane.b32.xlu0 %v717, 96
        %v772 = vpop.permute.xlu0 %771
        %v774 = vsel %vm724, %v717, 0
        %v777 = vsel %vm724, %v772, 0
        %779 = vmatprep.subr.bf16.mxu0 0
        %780 = vmatpush1.bf16.xpose.msra.mxu0 %v777
        %781 = vmatprep.subr.bf16.mxu0 0
        %782 = vmatpush1.bf16.xpose.msra.mxu0 0
        %783 = vmatprep.subr.bf16.mxu0 0
        %784 = vmatpush1.bf16.xpose.msra.mxu0 0
        %785 = vmatprep.subr.bf16.mxu0 0
        %786 = vmatpush1.bf16.xpose.msra.mxu0 0
        %787 = vmatprep.subr.bf16.mxu0 0
        %788 = vmatpush1.bf16.xpose.msra.mxu0 0
        %789 = vmatprep.subr.bf16.mxu0 0
        %790 = vmatpush1.bf16.xpose.msra.mxu0 0
        %791 = vmatprep.subr.bf16.mxu0 0
        %792 = vmatpush1.bf16.xpose.msra.mxu0 0
        %793 = vmatprep.subr.bf16.mxu0 0
        %794 = vmatpush1.bf16.xpose.msra.mxu0 0
        %795 = vmatprep.subr.bf16.mxu0 0
        %796 = vmatpush1.bf16.xpose.msra.mxu0 0
        %797 = vmatprep.subr.bf16.mxu0 0
        %798 = vmatpush1.bf16.xpose.msra.mxu0 0
        %799 = vmatprep.subr.bf16.mxu0 0
        %800 = vmatpush1.bf16.xpose.msra.mxu0 0
        %801 = vmatprep.subr.bf16.mxu0 0
        %802 = vmatpush1.bf16.xpose.msra.mxu0 0
        %803 = vmatprep.subr.bf16.mxu0 0
        %804 = vmatpush1.bf16.xpose.msra.mxu0 0
        %805 = vmatprep.subr.bf16.mxu0 0
        %806 = vmatpush1.bf16.xpose.msra.mxu0 0
        %807 = vmatprep.subr.bf16.mxu0 0
        %808 = vmatpush1.bf16.xpose.msra.mxu0 0
        %809 = vmatprep.subr.bf16.mxu0 0
        %810 = vmatpush1.bf16.xpose.msra.mxu0 0
        %811 = vmatprep.mubr.bf16.mxu0 0
        %812 = vmatmul.mubr.bf16.gmra.mrb[0].mxu0 %v774
        %v813 = vpop.f32.mrb[0].mxu0
        %v814 = vadd.f32 0.0, %v813
        %v815 = vpop.f32.mrb[0].mxu0
        %v816 = vpop.f32.mrb[0].mxu0
        %v817 = vpop.f32.mrb[0].mxu0
        %818 = vdwg.mxu0
        %v819 = vmul.f32 %v766, 0.25
        %v820 = vmul.f32 %v814, 0.25
        %vm821 = vcmp.le.s32.totalorder %v721, %v719
        %v822 = vsel %vm821, 1, 0
        %vm823 = vcmp.eq.s32.totalorder %v822, 1
        %v824 = vsel %vm823, %v819, -1e+30
        %v825 = vsel %vm823, %v820, -1e+30
        %vm826 = vcmask 64512
        %v827 = vsel %vm826, %v824, -inf
        %828 = vmax.xlane.f32.xlu0 %v827
        %v829 = vpop.xlane.xlu0 %828
        %v830 = vsel %vm826, %v825, -inf
        %831 = vmax.xlane.f32.xlu0 %v830
        %v832 = vpop.xlane.xlu0 %831
        %v833 = vmax.f32 %v829, -1e+30
        %v834 = vmax.f32 %v832, -1e+30
        %v835 = vsub.f32 -1e+30, %v833
        %v836 = vsub.f32 -1e+30, %v834
        %v837 = vmul.f32 %v835, 1.442695
        %v838 = vpow.pop %v837
        %v839 = vmul.f32 %v836, 1.442695
        %v840 = vpow.pop %v839
        %v841 = vsub.f32 %v824, %v833
        %v842 = vsub.f32 %v825, %v834
        %v843 = vmul.f32 %v841, 1.442695
        %v844 = vpow.pop %v843
        %v845 = vmul.f32 %v842, 1.442695
        %v846 = vpow.pop %v845
        %v847 = vmul.f32 %v838, 0.0
        %v848 = vmul.f32 %v840, 0.0
        %v849 = vsel %vm826, %v844, 0.0
        %850 = vadd.xlane.f32.xlu0 %v849
        %v851 = vpop.xlane.xlu0 %850
        %v852 = vsel %vm826, %v846, 0.0
        %853 = vadd.xlane.f32.xlu0 %v852
        %v854 = vpop.xlane.xlu0 %853
        %v855 = vadd.f32 %v847, %v851
        %v856 = vadd.f32 %v848, %v854
        %v857 = vpack.c.bf16 %v844, %v844
        %v858 = vpack.c.bf16 %v846, %v846
        %859 = vrot.lane.b32.xlu0 %v714, 64
        %v860 = vpop.permute.xlu0 %859
        %v862 = vsel %vm826, %v857, 0
        %vm864 = vcmask 1043456
        %v866 = vsel %vm864, %v860, 0
        %868 = vmatprep.subr.bf16.mxu0 0
        %869 = vmatpush1.bf16.msra.mxu0 %v866
        %870 = vmatprep.subr.bf16.mxu0 0
        %871 = vmatpush1.bf16.msra.mxu0 0
        %872 = vmatprep.subr.bf16.mxu0 0
        %873 = vmatpush1.bf16.msra.mxu0 0
        %874 = vmatprep.subr.bf16.mxu0 0
        %875 = vmatpush1.bf16.msra.mxu0 0
        %876 = vmatprep.subr.bf16.mxu0 0
        %877 = vmatpush1.bf16.msra.mxu0 0
        %878 = vmatprep.subr.bf16.mxu0 0
        %879 = vmatpush1.bf16.msra.mxu0 0
        %880 = vmatprep.subr.bf16.mxu0 0
        %881 = vmatpush1.bf16.msra.mxu0 0
        %882 = vmatprep.subr.bf16.mxu0 0
        %883 = vmatpush1.bf16.msra.mxu0 0
        %884 = vmatprep.subr.bf16.mxu0 0
        %885 = vmatpush1.bf16.msra.mxu0 0
        %886 = vmatprep.subr.bf16.mxu0 0
        %887 = vmatpush1.bf16.msra.mxu0 0
        %888 = vmatprep.subr.bf16.mxu0 0
        %889 = vmatpush1.bf16.msra.mxu0 0
        %890 = vmatprep.subr.bf16.mxu0 0
        %891 = vmatpush1.bf16.msra.mxu0 0
        %892 = vmatprep.subr.bf16.mxu0 0
        %893 = vmatpush1.bf16.msra.mxu0 0
        %894 = vmatprep.subr.bf16.mxu0 0
        %895 = vmatpush1.bf16.msra.mxu0 0
        %896 = vmatprep.subr.bf16.mxu0 0
        %897 = vmatpush1.bf16.msra.mxu0 0
        %898 = vmatprep.subr.bf16.mxu0 0
        %899 = vmatpush1.bf16.msra.mxu0 0
        %900 = vmatprep.mubr.bf16.mxu0 0
        %901 = vmatmul.mubr.bf16.gmra.mrb[0].mxu0 %v862
        %v902 = vpop.f32.mrb[0].mxu0
        %v903 = vadd.f32 0.0, %v902
        %v904 = vpop.f32.mrb[0].mxu0
        %v905 = vpop.f32.mrb[0].mxu0
        %v906 = vpop.f32.mrb[0].mxu0
        %907 = vdwg.mxu0
        %908 = vrot.lane.b32.xlu0 %v717, 64
        %v909 = vpop.permute.xlu0 %908
        %v911 = vsel %vm826, %v858, 0
        %v914 = vsel %vm864, %v909, 0
        %916 = vmatprep.subr.bf16.mxu0 0
        %917 = vmatpush1.bf16.msra.mxu0 %v914
        %918 = vmatprep.subr.bf16.mxu0 0
        %919 = vmatpush1.bf16.msra.mxu0 0
        %920 = vmatprep.subr.bf16.mxu0 0
        %921 = vmatpush1.bf16.msra.mxu0 0
        %922 = vmatprep.subr.bf16.mxu0 0
        %923 = vmatpush1.bf16.msra.mxu0 0
        %924 = vmatprep.subr.bf16.mxu0 0
        %925 = vmatpush1.bf16.msra.mxu0 0
        %926 = vmatprep.subr.bf16.mxu0 0
        %927 = vmatpush1.bf16.msra.mxu0 0
        %928 = vmatprep.subr.bf16.mxu0 0
        %929 = vmatpush1.bf16.msra.mxu0 0
        %930 = vmatprep.subr.bf16.mxu0 0
        %931 = vmatpush1.bf16.msra.mxu0 0
        %932 = vmatprep.subr.bf16.mxu0 0
        %933 = vmatpush1.bf16.msra.mxu0 0
        %934 = vmatprep.subr.bf16.mxu0 0
        %935 = vmatpush1.bf16.msra.mxu0 0
        %936 = vmatprep.subr.bf16.mxu0 0
        %937 = vmatpush1.bf16.msra.mxu0 0
        %938 = vmatprep.subr.bf16.mxu0 0
        %939 = vmatpush1.bf16.msra.mxu0 0
        %940 = vmatprep.subr.bf16.mxu0 0
        %941 = vmatpush1.bf16.msra.mxu0 0
        %942 = vmatprep.subr.bf16.mxu0 0
        %943 = vmatpush1.bf16.msra.mxu0 0
        %944 = vmatprep.subr.bf16.mxu0 0
        %945 = vmatpush1.bf16.msra.mxu0 0
        %946 = vmatprep.subr.bf16.mxu0 0
        %947 = vmatpush1.bf16.msra.mxu0 0
        %948 = vmatprep.mubr.bf16.mxu0 0
        %949 = vmatmul.mubr.bf16.gmra.mrb[0].mxu0 %v911
        %v950 = vpop.f32.mrb[0].mxu0
        %v951 = vadd.f32 0.0, %v950
        %v952 = vpop.f32.mrb[0].mxu0
        %v953 = vpop.f32.mrb[0].mxu0
        %v954 = vpop.f32.mrb[0].mxu0
        %955 = vdwg.mxu0
        %v956 = vadd.f32 %v847, %v903
        %v957 = vadd.f32 %v848, %v951
        %v958 = vrcp.pop %v855
        %v959 = vmul.f32 %v956, %v958
        %v960 = vrcp.pop %v856
        %v961 = vmul.f32 %v957, %v960
        %963 = vrot.lane.b32.xlu0 %v961, 16
        %v964 = vpop.permute.xlu0 %963
        %v966 = vsel %vm724, %v959, %v964
        %v967 = vpack.c.bf16 %v966, %v966
        %v968 = vld [vmem:[#allocation11] sm:$0xf]
        %v969 = vld [vmem:[#allocation11 + $0x4] sm:$0xf]
        %v970 = vld [vmem:[#allocation11 + $0x8] sm:$0xf]
        %v971 = vld [vmem:[#allocation11 + $0xc] sm:$0xf]
        %v972 = vld [vmem:[#allocation13] sm:$0x1]
        %v974 = vlaneseq
        %v975 = vshrl.u32 %v974, 7
        %v976 = vsub.s32 0, %v975
        %v977 = vrot.slane %v972, %v976
        %v983 = vunpack.c.l.b16 %v968
        %v984 = vunpack.c.l.b16 %v969
        %v985 = vunpack.c.l.b16 %v970
        %v986 = vunpack.c.l.b16 %v971
        %v987 = vpack.c.b16 %v984, %v983
        %v988 = vpack.c.b16 %v986, %v985
        %v992 = vsel %vm618, %v967, 0
        %994 = vmatprep.subr.bf16.mxu0 0
        %995 = vmatpush1.bf16.msra.mxu0 %v987
        %996 = vmatprep.subr.bf16.mxu0 0
        %997 = vmatpush1.bf16.msra.mxu0 %v988
        %998 = vmatprep.subr.bf16.mxu0 0
        %999 = vmatpush1.bf16.msra.mxu0 0
        %1000 = vmatprep.subr.bf16.mxu0 0
        %1001 = vmatpush1.bf16.msra.mxu0 0
        %1002 = vmatprep.subr.bf16.mxu0 0
        %1003 = vmatpush1.bf16.msra.mxu0 0
        %1004 = vmatprep.subr.bf16.mxu0 0
        %1005 = vmatpush1.bf16.msra.mxu0 0
        %1006 = vmatprep.subr.bf16.mxu0 0
        %1007 = vmatpush1.bf16.msra.mxu0 0
        %1008 = vmatprep.subr.bf16.mxu0 0
        %1009 = vmatpush1.bf16.msra.mxu0 0
        %1010 = vmatprep.subr.bf16.mxu0 0
        %1011 = vmatpush1.bf16.msra.mxu0 0
        %1012 = vmatprep.subr.bf16.mxu0 0
        %1013 = vmatpush1.bf16.msra.mxu0 0
        %1014 = vmatprep.subr.bf16.mxu0 0
        %1015 = vmatpush1.bf16.msra.mxu0 0
        %1016 = vmatprep.subr.bf16.mxu0 0
        %1017 = vmatpush1.bf16.msra.mxu0 0
        %1018 = vmatprep.subr.bf16.mxu0 0
        %1019 = vmatpush1.bf16.msra.mxu0 0
        %1020 = vmatprep.subr.bf16.mxu0 0
        %1021 = vmatpush1.bf16.msra.mxu0 0
        %1022 = vmatprep.subr.bf16.mxu0 0
        %1023 = vmatpush1.bf16.msra.mxu0 0
        %1024 = vmatprep.subr.bf16.mxu0 0
        %1025 = vmatpush1.bf16.msra.mxu0 0
        %1026 = vmatprep.mubr.bf16.mxu0 0
        %1027 = vmatmul.mubr.bf16.gmra.mrb[0].mxu0 %v992
        %v1028 = vpop.f32.mrb[0].mxu0
        %v1029 = vadd.f32 %v977, %v1028
        %v1030 = vpop.f32.mrb[0].mxu0
        %v1031 = vpop.f32.mrb[0].mxu0
        %v1032 = vpop.f32.mrb[0].mxu0
        %1033 = vdwg.mxu0
        %v1034 = vadd.f32 %v615, %v1029
        %v1035 = vld [vmem:[#allocation14] sm:$0x1]
        %v1036 = vld [vmem:[#allocation16] sm:$0x1]
        %v1037 = vsel %vm618, %v1034, 0.0
        %1038 = vadd.xlane.f32.xlu0 %v1037
        %v1039 = vpop.xlane.xlu0 %1038
        %v1040 = vmul.f32 %v1039, %v622
        %v1041 = vsub.f32 %v1034, %v1040
        %v1042 = vmul.f32 %v1041, %v1041
        %v1043 = vsel %vm618, %v1042, 0.0
        %1044 = vadd.xlane.f32.xlu0 %v1043
        %v1045 = vpop.xlane.xlu0 %1044
        %v1046 = vmul.f32 %v1045, %v622
        %v1047 = vadd.f32 %v1046, 1e-05
        %v1048 = vrsqrt.pop %v1047
        %v1049 = vmul.f32 %v1041, %v1048
        %v1051 = vlaneseq
        %v1052 = vshrl.u32 %v1051, 7
        %v1053 = vsub.s32 0, %v1052
        %v1054 = vrot.slane %v1035, %v1053
        %v1056 = vmul.f32 %v1049, %v1054
        %v1058 = vlaneseq
        %v1059 = vshrl.u32 %v1058, 7
        %v1060 = vsub.s32 0, %v1059
        %v1061 = vrot.slane %v1036, %v1060
        %v1063 = vadd.f32 %v1056, %v1061
        %v1064 = vpack.c.bf16 %v1063, %v1063
        %v1065 = vld [vmem:[#allocation17] sm:$0xf]
        %v1066 = vld [vmem:[#allocation17 + $0x4] sm:$0xf]
        %v1067 = vld [vmem:[#allocation17 + $0x8] sm:$0xf]
        %v1068 = vld [vmem:[#allocation17 + $0xc] sm:$0xf]
        %v1069 = vld [vmem:[#allocation19] sm:$0x1]
        %v1071 = vlaneseq
        %v1072 = vshrl.u32 %v1071, 7
        %v1073 = vsub.s32 0, %v1072
        %v1074 = vrot.slane %v1069, %v1073
        %v1080 = vunpack.c.l.b16 %v1065
        %v1081 = vunpack.c.l.b16 %v1066
        %v1082 = vunpack.c.l.b16 %v1067
        %v1083 = vunpack.c.l.b16 %v1068
        %v1084 = vpack.c.b16 %v1081, %v1080
        %v1085 = vpack.c.b16 %v1083, %v1082
        %v1089 = vsel %vm618, %v1064, 0
        %1091 = vmatprep.subr.bf16.mxu0 0
        %1092 = vmatpush1.bf16.msra.mxu0 %v1084
        %1093 = vmatprep.subr.bf16.mxu0 0
        %1094 = vmatpush1.bf16.msra.mxu0 %v1085
        %1095 = vmatprep.subr.bf16.mxu0 0
        %1096 = vmatpush1.bf16.msra.mxu0 0
        %1097 = vmatprep.subr.bf16.mxu0 0
        %1098 = vmatpush1.bf16.msra.mxu0 0
        %1099 = vmatprep.subr.bf16.mxu0 0
        %1100 = vmatpush1.bf16.msra.mxu0 0
        %1101 = vmatprep.subr.bf16.mxu0 0
        %1102 = vmatpush1.bf16.msra.mxu0 0
        %1103 = vmatprep.subr.bf16.mxu0 0
        %1104 = vmatpush1.bf16.msra.mxu0 0
        %1105 = vmatprep.subr.bf16.mxu0 0
        %1106 = vmatpush1.bf16.msra.mxu0 0
        %1107 = vmatprep.subr.bf16.mxu0 0
        %1108 = vmatpush1.bf16.msra.mxu0 0
        %1109 = vmatprep.subr.bf16.mxu0 0
        %1110 = vmatpush1.bf16.msra.mxu0 0
        %1111 = vmatprep.subr.bf16.mxu0 0
        %1112 = vmatpush1.bf16.msra.mxu0 0
        %1113 = vmatprep.subr.bf16.mxu0 0
        %1114 = vmatpush1.bf16.msra.mxu0 0
        %1115 = vmatprep.subr.bf16.mxu0 0
        %1116 = vmatpush1.bf16.msra.mxu0 0
        %1117 = vmatprep.subr.bf16.mxu0 0
        %1118 = vmatpush1.bf16.msra.mxu0 0
        %1119 = vmatprep.subr.bf16.mxu0 0
        %1120 = vmatpush1.bf16.msra.mxu0 0
        %1121 = vmatprep.subr.bf16.mxu0 0
        %1122 = vmatpush1.bf16.msra.mxu0 0
        %1123 = vmatprep.mubr.bf16.mxu0 0
        %1124 = vmatmul.mubr.bf16.gmra.mrb[0].mxu0 %v1089
        %v1125 = vpop.f32.mrb[0].mxu0
        %v1126 = vadd.f32 %v1074, %v1125
        %v1127 = vpop.f32.mrb[0].mxu0
        %v1128 = vpop.f32.mrb[0].mxu0
        %v1129 = vpop.f32.mrb[0].mxu0
        %1130 = vdwg.mxu0
        %v1131 = vmul.f32 %v1126, 0.5
        %v1132 = vmul.f32 %v1126, 0.044715
        %v1133 = vmul.f32 %v1132, %v1126
        %v1134 = vmul.f32 %v1133, %v1126
        %v1135 = vadd.f32 %v1126, %v1134
        %v1136 = vmul.f32 %v1135, 0.7978846
        %v1137 = vtanh.pop %v1136
        %v1138 = vadd.f32 %v1137, 1.0
        %v1139 = vmul.f32 %v1131, %v1138
        %v1140 = vpack.c.bf16 %v1139, %v1139
        %v1141 = vld [vmem:[#allocation20] sm:$0xf]
        %v1142 = vld [vmem:[#allocation20 + $0x4] sm:$0xf]
        %v1143 = vld [vmem:[#allocation20 + $0x8] sm:$0xf]
        %v1144 = vld [vmem:[#allocation20 + $0xc] sm:$0xf]
        %v1145 = vld [vmem:[#allocation20 + $0x10] sm:$0xf]
        %v1146 = vld [vmem:[#allocation20 + $0x14] sm:$0xf]
        %v1147 = vld [vmem:[#allocation20 + $0x18] sm:$0xf]
        %v1148 = vld [vmem:[#allocation20 + $0x1c] sm:$0xf]
        %v1149 = vld [vmem:[#allocation20 + $0x20] sm:$0xf]
        %v1150 = vld [vmem:[#allocation20 + $0x24] sm:$0xf]
        %v1151 = vld [vmem:[#allocation20 + $0x28] sm:$0xf]
        %v1152 = vld [vmem:[#allocation20 + $0x2c] sm:$0xf]
        %v1153 = vld [vmem:[#allocation20 + $0x30] sm:$0xf]
        %v1154 = vld [vmem:[#allocation20 + $0x34] sm:$0xf]
        %v1155 = vld [vmem:[#allocation20 + $0x38] sm:$0xf]
        %v1156 = vld [vmem:[#allocation20 + $0x3c] sm:$0xf]
        %v1157 = vld [vmem:[#allocation22] sm:$0x1]
        %v1159 = vlaneseq
        %v1160 = vshrl.u32 %v1159, 7
        %v1161 = vsub.s32 0, %v1160
        %v1162 = vrot.slane %v1157, %v1161
        %v1180 = vunpack.c.l.b16 %v1141
        %v1181 = vunpack.c.l.b16 %v1142
        %v1182 = vunpack.c.l.b16 %v1143
        %v1183 = vunpack.c.l.b16 %v1144
        %v1184 = vunpack.c.l.b16 %v1145
        %v1185 = vunpack.c.l.b16 %v1146
        %v1186 = vunpack.c.l.b16 %v1147
        %v1187 = vunpack.c.l.b16 %v1148
        %v1188 = vunpack.c.l.b16 %v1149
        %v1189 = vunpack.c.l.b16 %v1150
        %v1190 = vunpack.c.l.b16 %v1151
        %v1191 = vunpack.c.l.b16 %v1152
        %v1192 = vunpack.c.l.b16 %v1153
        %v1193 = vunpack.c.l.b16 %v1154
        %v1194 = vunpack.c.l.b16 %v1155
        %v1195 = vunpack.c.l.b16 %v1156
        %v1196 = vpack.c.b16 %v1181, %v1180
        %v1197 = vpack.c.b16 %v1183, %v1182
        %v1198 = vpack.c.b16 %v1185, %v1184
        %v1199 = vpack.c.b16 %v1187, %v1186
        %v1200 = vpack.c.b16 %v1189, %v1188
        %v1201 = vpack.c.b16 %v1191, %v1190
        %v1202 = vpack.c.b16 %v1193, %v1192
        %v1203 = vpack.c.b16 %v1195, %v1194
        %1212 = vmatprep.subr.bf16.mxu0 0
        %1213 = vmatpush1.bf16.msra.mxu0 %v1196
        %1214 = vmatprep.subr.bf16.mxu0 0
        %1215 = vmatpush1.bf16.msra.mxu0 %v1197
        %1216 = vmatprep.subr.bf16.mxu0 0
        %1217 = vmatpush1.bf16.msra.mxu0 %v1198
        %1218 = vmatprep.subr.bf16.mxu0 0
        %1219 = vmatpush1.bf16.msra.mxu0 %v1199
        %1220 = vmatprep.subr.bf16.mxu0 0
        %1221 = vmatpush1.bf16.msra.mxu0 %v1200
        %1222 = vmatprep.subr.bf16.mxu0 0
        %1223 = vmatpush1.bf16.msra.mxu0 %v1201
        %1224 = vmatprep.subr.bf16.mxu0 0
        %1225 = vmatpush1.bf16.msra.mxu0 %v1202
        %1226 = vmatprep.subr.bf16.mxu0 0
        %1227 = vmatpush1.bf16.msra.mxu0 %v1203
        %1228 = vmatprep.subr.bf16.mxu0 0
        %1229 = vmatpush1.bf16.msra.mxu0 0
        %1230 = vmatprep.subr.bf16.mxu0 0
        %1231 = vmatpush1.bf16.msra.mxu0 0
        %1232 = vmatprep.subr.bf16.mxu0 0
        %1233 = vmatpush1.bf16.msra.mxu0 0
        %1234 = vmatprep.subr.bf16.mxu0 0
        %1235 = vmatpush1.bf16.msra.mxu0 0
        %1236 = vmatprep.subr.bf16.mxu0 0
        %1237 = vmatpush1.bf16.msra.mxu0 0
        %1238 = vmatprep.subr.bf16.mxu0 0
        %1239 = vmatpush1.bf16.msra.mxu0 0
        %1240 = vmatprep.subr.bf16.mxu0 0
        %1241 = vmatpush1.bf16.msra.mxu0 0
        %1242 = vmatprep.subr.bf16.mxu0 0
        %1243 = vmatpush1.bf16.msra.mxu0 0
        %1244 = vmatprep.mubr.bf16.mxu0 0
        %1245 = vmatmul.mubr.bf16.gmra.mrb[0].mxu0 %v1140
        %v1246 = vpop.f32.mrb[0].mxu0
        %v1247 = vadd.f32 %v1162, %v1246
        %v1248 = vpop.f32.mrb[0].mxu0
        %v1249 = vpop.f32.mrb[0].mxu0
        %v1250 = vpop.f32.mrb[0].mxu0
        %1251 = vdwg.mxu0
        %v1252 = vadd.f32 %v1034, %v1247
        %1253 = vst.msk [vmem:[%s613] sm:$0xff] %vm618, %v1252
        %s1254 = sand.u32 %s322, 1
        %s1255 = scalar_lea.sflag [#allocation4], %s1254
        %s1256 = sand.u32 %s322, 1
        %s1257 = smul.addr %s1256, 8
        %s1258 = scalar_lea.vmem [#allocation23], %s1257
        // Predicated region
        $region125: #{tpu_custom_call.1} parent=71 // pred_check
          %p1259 = pneg %p332
        $region126: #{tpu_custom_call.1} parent=71 // pred_check_branch
          %1261 = sbr.rel (%p1259) target = $region128
        $region127: #{tpu_custom_call.1} parent=71 // pred_region
          %s1263 = ssub.s32 128, 128
          %1264 = vsyncadd %s1255, %s1263
          %s1265 = smul.addr %s36, 128
          %s1266 = scalar_lea.hbm %s13, %s1265
          %s1268 = sshll.u32 %s1258, 4
          %s1269 = int_to_ptr.vmem [resolvable:$true] %s1268
          %1271 = dma.vmem_to_hbm [thread:$0]  %s1269, 128, %s1266, %s1255
        $region128: #{tpu_custom_call.1} parent=71 // pred_fallthru
          _
      $region72: #{tpu_custom_call.1} parent=5 // pred_fallthru
        _
      %p1272 = scmp.le.s32.totalorder 2, %s31
      // Predicated region
      $region129: #{tpu_custom_call.1} parent=5 // pred_check
        %p1273 = pneg %p1272
      $region130: #{tpu_custom_call.1} parent=5 // pred_check_branch
        %1275 = sbr.rel (%p1273) target = $region132
      $region131: #{tpu_custom_call.1} parent=5 // pred_region
        %s1276 = ssub.s32 %s31, 2
        // Predicated region
        $region133: #{tpu_custom_call.1} parent=131 // pred_check
          %p1277 = pneg %p338
        $region134: #{tpu_custom_call.1} parent=131 // pred_check_branch
          %1279 = sbr.rel (%p1277) target = $region136
        $region135: #{tpu_custom_call.1} parent=131 // pred_region
          %s1280 = sand.u32 %s323, 1
          %s1281 = scalar_lea.sflag [#allocation4], %s1280
          %s1282 = sand.u32 %s323, 1
          %s1283 = smul.addr %s1282, 8
          %s1284 = scalar_lea.vmem [#allocation23], %s1283
          %1285 = dma.done %s1281, 128
        $region136: #{tpu_custom_call.1} parent=131 // pred_fallthru
          _
      $region132: #{tpu_custom_call.1} parent=5 // pred_fallthru
        _
    $region6: #{tpu_custom_call.1} parent=1 // loop_footer
      %s35 = sadd.s32 1, %s31
    $region7: #{tpu_custom_call.1} parent=1 // loop_footer_branch
      %30 = sbr.rel target = $region3
    $region8: #{tpu_custom_call.1} parent=1 // loop_exit
      _
    %1286 = vsyncpa [#allocation3], 1
    %s1287 = scalar_lea.sflag [#allocation3], 1
    %1288 = vsyncpa %s1287, 1
    %1289 = vsyncpa [#allocation6], 1
    %1290 = vsyncpa [#allocation9], 1
    %1291 = vsyncpa [#allocation12], 1
    %1292 = vsyncpa [#allocation15], 1
    %1293 = vsyncpa [#allocation18], 1
    %1294 = vsyncpa [#allocation21], 1
    %1295 = vsyncpa [#allocation4], 1
    %s1296 = scalar_lea.sflag [#allocation4], 1
    %1297 = vsyncpa %s1296, 1

</llo_original>
